<compile_context>
chip_gen: v7x
topology: tpu7x:2x2x1
jax: 0.10.0
libtpu: 0.0.40
codegen_flags: <defaults>
</compile_context>

<pallas_src>
import jax
import jax.numpy as jnp
from jax.experimental import pallas as pl
from jax.experimental.pallas import tpu as pltpu


def _fused_kernel(x_ref, w_ref, b_ref, o_ref):
    # x_ref: (N, C_in, HW)   w_ref: (C_in, C_out)   b_ref: (1, C_out)
    # o_ref: (N, C_out, HW)
    w_t = w_ref[...].T        # (C_out, C_in): tiny one-time in-VMEM transpose
    b_col = b_ref[...].T      # (C_out, 1): broadcasts along lanes below
    n_batch = x_ref.shape[0]
    for n in range(n_batch):  # static unroll; N is small
        y = jnp.dot(w_t, x_ref[n], preferred_element_type=jnp.float32)  # (C_out, HW)
        y = y + b_col
        o_ref[n] = jnp.where(y > 0, y, y * (-0.25)).astype(o_ref.dtype)


def _conv_transpose_1x1_leaky(x_nchw, w, b):
    """x_nchw: (N, C_in, H, W) f32; w: (C_in, C_out) f32; b: (C_out,) f32."""
    N, C_in, H, W = x_nchw.shape
    C_out = w.shape[1]
    HW = H * W

    x_rows = x_nchw.reshape(N, C_in, HW)   # free reshape (no data movement)
    b_row = b.reshape(1, C_out)            # free reshape

    vmem = pl.BlockSpec(memory_space=pltpu.MemorySpace.VMEM)

    out_rows = pl.pallas_call(
        _fused_kernel,
        out_shape=jax.ShapeDtypeStruct((N, C_out, HW), jnp.float32),
        in_specs=[vmem, vmem, vmem],
        out_specs=vmem,
        cost_estimate=pl.CostEstimate(
            flops=2 * N * HW * C_in * C_out,
            transcendentals=0,
            bytes_accessed=(N * C_in * HW + C_in * C_out + C_out
                            + N * C_out * HW) * 4,
        ),
    )(x_rows, w, b_row)

    return out_rows.reshape(N, C_out, H, W)   # free reshape back to NCHW


conv_transpose_1x1_leaky = jax.jit(_conv_transpose_1x1_leaky)


if __name__ == "__main__":
    key = jax.random.PRNGKey(0)
    k_x, k_w, k_b = jax.random.split(key, 3)

    N, C_in, H, W = 8, 19, 4, 4
    C_out = 64

    # Deterministic synthetic inputs / parameters (no checkpoint load).
    x2 = jax.random.normal(k_x, (N, C_in, H, W), dtype=jnp.float32)
    # PyTorch ConvTranspose2d weight has shape (C_in, C_out, 1, 1); squeezed to (C_in, C_out).
    bound = 1.0 / (C_in ** 0.5)
    w = jax.random.uniform(k_w, (C_in, C_out), minval=-bound, maxval=bound,
                           dtype=jnp.float32)
    b = jax.random.uniform(k_b, (C_out,), minval=-bound, maxval=bound,
                           dtype=jnp.float32)

    out = conv_transpose_1x1_leaky(x2, w, b)
    out = jax.block_until_ready(out)

    # Pure-JAX reference check.
    ref = jnp.einsum("nchw,co->nohw", x2, w) + b[None, :, None, None]
    ref = jnp.where(ref > 0, ref, ref * -0.25)
    assert out.shape == (N, C_out, H, W)
    assert jnp.allclose(out, ref, atol=1e-5, rtol=1e-5)

    print("KERNEL_OK")
</pallas_src>

<mosaic_0001>
module attributes {stable_mosaic.version = 11 : i64} {
  func.func @_fused_kernel(%arg0: memref<8x19x16xf32, #tpu.memory_space<vmem>>, %arg1: memref<19x64xf32, #tpu.memory_space<vmem>>, %arg2: memref<1x64xf32, #tpu.memory_space<vmem>>, %arg3: memref<8x64x16xf32, #tpu.memory_space<vmem>>) attributes {dimension_semantics = [], scalar_prefetch = 0 : i64, scratch_operands = 0 : i64, tpu.core_type = #tpu.core_type<tc>} {
    %c0 = arith.constant 0 : index
    %c0_0 = arith.constant 0 : index
    %0 = vector.load %arg1[%c0, %c0_0] : memref<19x64xf32, #tpu.memory_space<vmem>>, vector<19x64xf32>
    %1 = tpu.transpose %0, [1, 0] : vector<19x64xf32> -> vector<64x19xf32>
    %c0_1 = arith.constant 0 : index
    %c0_2 = arith.constant 0 : index
    %2 = vector.load %arg2[%c0_1, %c0_2] : memref<1x64xf32, #tpu.memory_space<vmem>>, vector<1x64xf32>
    %3 = tpu.transpose %2, [1, 0] : vector<1x64xf32> -> vector<64x1xf32>
    %c0_3 = arith.constant 0 : index
    %c0_4 = arith.constant 0 : index
    %c0_5 = arith.constant 0 : index
    %4 = vector.load %arg0[%c0_3, %c0_4, %c0_5] : memref<8x19x16xf32, #tpu.memory_space<vmem>>, vector<1x19x16xf32>
    %5 = vector.shape_cast %4 : vector<1x19x16xf32> to vector<19x16xf32>
    %cst = arith.constant dense<0.000000e+00> : vector<64x16xf32>
    %6 = tpu.matmul %1, %5, %cst {dimension_numbers = #tpu.dot_dimension_numbers<[1], [0], [0], [1], [0, 0, 1, 1], [], []>} : vector<64x19xf32>, vector<19x16xf32>, vector<64x16xf32> -> vector<64x16xf32>
    %7 = vector.broadcast %3 : vector<64x1xf32> to vector<64x16xf32>
    %8 = arith.addf %6, %7 : vector<64x16xf32>
    %cst_6 = arith.constant 0.000000e+00 : f32
    %9 = vector.broadcast %cst_6 : f32 to vector<64x16xf32>
    %10 = arith.cmpf ogt, %8, %9 : vector<64x16xf32>
    %cst_7 = arith.constant -2.500000e-01 : f32
    %11 = vector.broadcast %cst_7 : f32 to vector<64x16xf32>
    %12 = arith.mulf %8, %11 : vector<64x16xf32>
    %13 = arith.select %10, %8, %12 : vector<64x16xi1>, vector<64x16xf32>
    %c0_8 = arith.constant 0 : index
    %c0_9 = arith.constant 0 : index
    %c0_10 = arith.constant 0 : index
    %14 = vector.load %arg3[%c0_8, %c0_9, %c0_10] : memref<8x64x16xf32, #tpu.memory_space<vmem>>, vector<1x64x16xf32>
    %15 = vector.shape_cast %14 : vector<1x64x16xf32> to vector<64x16xf32>
    %16 = vector.shape_cast %13 : vector<64x16xf32> to vector<1x64x16xf32>
    tpu.vector_store %arg3[%c0_8, %c0_9, %c0_10], %16 {strides = array<i32>} : memref<8x64x16xf32, #tpu.memory_space<vmem>>, vector<1x64x16xf32>,
    %c1 = arith.constant 1 : index
    %c0_11 = arith.constant 0 : index
    %c0_12 = arith.constant 0 : index
    %17 = vector.load %arg0[%c1, %c0_11, %c0_12] : memref<8x19x16xf32, #tpu.memory_space<vmem>>, vector<1x19x16xf32>
    %18 = vector.shape_cast %17 : vector<1x19x16xf32> to vector<19x16xf32>
    %cst_13 = arith.constant dense<0.000000e+00> : vector<64x16xf32>
    %19 = tpu.matmul %1, %18, %cst_13 {dimension_numbers = #tpu.dot_dimension_numbers<[1], [0], [0], [1], [0, 0, 1, 1], [], []>} : vector<64x19xf32>, vector<19x16xf32>, vector<64x16xf32> -> vector<64x16xf32>
    %20 = vector.broadcast %3 : vector<64x1xf32> to vector<64x16xf32>
    %21 = arith.addf %19, %20 : vector<64x16xf32>
    %cst_14 = arith.constant 0.000000e+00 : f32
    %22 = vector.broadcast %cst_14 : f32 to vector<64x16xf32>
    %23 = arith.cmpf ogt, %21, %22 : vector<64x16xf32>
    %cst_15 = arith.constant -2.500000e-01 : f32
    %24 = vector.broadcast %cst_15 : f32 to vector<64x16xf32>
    %25 = arith.mulf %21, %24 : vector<64x16xf32>
    %26 = arith.select %23, %21, %25 : vector<64x16xi1>, vector<64x16xf32>
    %c1_16 = arith.constant 1 : index
    %c0_17 = arith.constant 0 : index
    %c0_18 = arith.constant 0 : index
    %27 = vector.load %arg3[%c1_16, %c0_17, %c0_18] : memref<8x64x16xf32, #tpu.memory_space<vmem>>, vector<1x64x16xf32>
    %28 = vector.shape_cast %27 : vector<1x64x16xf32> to vector<64x16xf32>
    %29 = vector.shape_cast %26 : vector<64x16xf32> to vector<1x64x16xf32>
    tpu.vector_store %arg3[%c1_16, %c0_17, %c0_18], %29 {strides = array<i32>} : memref<8x64x16xf32, #tpu.memory_space<vmem>>, vector<1x64x16xf32>,
    %c2 = arith.constant 2 : index
    %c0_19 = arith.constant 0 : index
    %c0_20 = arith.constant 0 : index
    %30 = vector.load %arg0[%c2, %c0_19, %c0_20] : memref<8x19x16xf32, #tpu.memory_space<vmem>>, vector<1x19x16xf32>
    %31 = vector.shape_cast %30 : vector<1x19x16xf32> to vector<19x16xf32>
    %cst_21 = arith.constant dense<0.000000e+00> : vector<64x16xf32>
    %32 = tpu.matmul %1, %31, %cst_21 {dimension_numbers = #tpu.dot_dimension_numbers<[1], [0], [0], [1], [0, 0, 1, 1], [], []>} : vector<64x19xf32>, vector<19x16xf32>, vector<64x16xf32> -> vector<64x16xf32>
    %33 = vector.broadcast %3 : vector<64x1xf32> to vector<64x16xf32>
    %34 = arith.addf %32, %33 : vector<64x16xf32>
    %cst_22 = arith.constant 0.000000e+00 : f32
    %35 = vector.broadcast %cst_22 : f32 to vector<64x16xf32>
    %36 = arith.cmpf ogt, %34, %35 : vector<64x16xf32>
    %cst_23 = arith.constant -2.500000e-01 : f32
    %37 = vector.broadcast %cst_23 : f32 to vector<64x16xf32>
    %38 = arith.mulf %34, %37 : vector<64x16xf32>
    %39 = arith.select %36, %34, %38 : vector<64x16xi1>, vector<64x16xf32>
    %c2_24 = arith.constant 2 : index
    %c0_25 = arith.constant 0 : index
    %c0_26 = arith.constant 0 : index
    %40 = vector.load %arg3[%c2_24, %c0_25, %c0_26] : memref<8x64x16xf32, #tpu.memory_space<vmem>>, vector<1x64x16xf32>
    %41 = vector.shape_cast %40 : vector<1x64x16xf32> to vector<64x16xf32>
    %42 = vector.shape_cast %39 : vector<64x16xf32> to vector<1x64x16xf32>
    tpu.vector_store %arg3[%c2_24, %c0_25, %c0_26], %42 {strides = array<i32>} : memref<8x64x16xf32, #tpu.memory_space<vmem>>, vector<1x64x16xf32>,
    %c3 = arith.constant 3 : index
    %c0_27 = arith.constant 0 : index
    %c0_28 = arith.constant 0 : index
    %43 = vector.load %arg0[%c3, %c0_27, %c0_28] : memref<8x19x16xf32, #tpu.memory_space<vmem>>, vector<1x19x16xf32>
    %44 = vector.shape_cast %43 : vector<1x19x16xf32> to vector<19x16xf32>
    %cst_29 = arith.constant dense<0.000000e+00> : vector<64x16xf32>
    %45 = tpu.matmul %1, %44, %cst_29 {dimension_numbers = #tpu.dot_dimension_numbers<[1], [0], [0], [1], [0, 0, 1, 1], [], []>} : vector<64x19xf32>, vector<19x16xf32>, vector<64x16xf32> -> vector<64x16xf32>
    %46 = vector.broadcast %3 : vector<64x1xf32> to vector<64x16xf32>
    %47 = arith.addf %45, %46 : vector<64x16xf32>
    %cst_30 = arith.constant 0.000000e+00 : f32
    %48 = vector.broadcast %cst_30 : f32 to vector<64x16xf32>
    %49 = arith.cmpf ogt, %47, %48 : vector<64x16xf32>
    %cst_31 = arith.constant -2.500000e-01 : f32
    %50 = vector.broadcast %cst_31 : f32 to vector<64x16xf32>
    %51 = arith.mulf %47, %50 : vector<64x16xf32>
    %52 = arith.select %49, %47, %51 : vector<64x16xi1>, vector<64x16xf32>
    %c3_32 = arith.constant 3 : index
    %c0_33 = arith.constant 0 : index
    %c0_34 = arith.constant 0 : index
    %53 = vector.load %arg3[%c3_32, %c0_33, %c0_34] : memref<8x64x16xf32, #tpu.memory_space<vmem>>, vector<1x64x16xf32>
    %54 = vector.shape_cast %53 : vector<1x64x16xf32> to vector<64x16xf32>
    %55 = vector.shape_cast %52 : vector<64x16xf32> to vector<1x64x16xf32>
    tpu.vector_store %arg3[%c3_32, %c0_33, %c0_34], %55 {strides = array<i32>} : memref<8x64x16xf32, #tpu.memory_space<vmem>>, vector<1x64x16xf32>,
    %c4 = arith.constant 4 : index
    %c0_35 = arith.constant 0 : index
    %c0_36 = arith.constant 0 : index
    %56 = vector.load %arg0[%c4, %c0_35, %c0_36] : memref<8x19x16xf32, #tpu.memory_space<vmem>>, vector<1x19x16xf32>
    %57 = vector.shape_cast %56 : vector<1x19x16xf32> to vector<19x16xf32>
    %cst_37 = arith.constant dense<0.000000e+00> : vector<64x16xf32>
    %58 = tpu.matmul %1, %57, %cst_37 {dimension_numbers = #tpu.dot_dimension_numbers<[1], [0], [0], [1], [0, 0, 1, 1], [], []>} : vector<64x19xf32>, vector<19x16xf32>, vector<64x16xf32> -> vector<64x16xf32>
    %59 = vector.broadcast %3 : vector<64x1xf32> to vector<64x16xf32>
    %60 = arith.addf %58, %59 : vector<64x16xf32>
    %cst_38 = arith.constant 0.000000e+00 : f32
    %61 = vector.broadcast %cst_38 : f32 to vector<64x16xf32>
    %62 = arith.cmpf ogt, %60, %61 : vector<64x16xf32>
    %cst_39 = arith.constant -2.500000e-01 : f32
    %63 = vector.broadcast %cst_39 : f32 to vector<64x16xf32>
    %64 = arith.mulf %60, %63 : vector<64x16xf32>
    %65 = arith.select %62, %60, %64 : vector<64x16xi1>, vector<64x16xf32>
    %c4_40 = arith.constant 4 : index
    %c0_41 = arith.constant 0 : index
    %c0_42 = arith.constant 0 : index
    %66 = vector.load %arg3[%c4_40, %c0_41, %c0_42] : memref<8x64x16xf32, #tpu.memory_space<vmem>>, vector<1x64x16xf32>
    %67 = vector.shape_cast %66 : vector<1x64x16xf32> to vector<64x16xf32>
    %68 = vector.shape_cast %65 : vector<64x16xf32> to vector<1x64x16xf32>
    tpu.vector_store %arg3[%c4_40, %c0_41, %c0_42], %68 {strides = array<i32>} : memref<8x64x16xf32, #tpu.memory_space<vmem>>, vector<1x64x16xf32>,
    %c5 = arith.constant 5 : index
    %c0_43 = arith.constant 0 : index
    %c0_44 = arith.constant 0 : index
    %69 = vector.load %arg0[%c5, %c0_43, %c0_44] : memref<8x19x16xf32, #tpu.memory_space<vmem>>, vector<1x19x16xf32>
    %70 = vector.shape_cast %69 : vector<1x19x16xf32> to vector<19x16xf32>
    %cst_45 = arith.constant dense<0.000000e+00> : vector<64x16xf32>
    %71 = tpu.matmul %1, %70, %cst_45 {dimension_numbers = #tpu.dot_dimension_numbers<[1], [0], [0], [1], [0, 0, 1, 1], [], []>} : vector<64x19xf32>, vector<19x16xf32>, vector<64x16xf32> -> vector<64x16xf32>
    %72 = vector.broadcast %3 : vector<64x1xf32> to vector<64x16xf32>
    %73 = arith.addf %71, %72 : vector<64x16xf32>
    %cst_46 = arith.constant 0.000000e+00 : f32
    %74 = vector.broadcast %cst_46 : f32 to vector<64x16xf32>
    %75 = arith.cmpf ogt, %73, %74 : vector<64x16xf32>
    %cst_47 = arith.constant -2.500000e-01 : f32
    %76 = vector.broadcast %cst_47 : f32 to vector<64x16xf32>
    %77 = arith.mulf %73, %76 : vector<64x16xf32>
    %78 = arith.select %75, %73, %77 : vector<64x16xi1>, vector<64x16xf32>
    %c5_48 = arith.constant 5 : index
    %c0_49 = arith.constant 0 : index
    %c0_50 = arith.constant 0 : index
    %79 = vector.load %arg3[%c5_48, %c0_49, %c0_50] : memref<8x64x16xf32, #tpu.memory_space<vmem>>, vector<1x64x16xf32>
    %80 = vector.shape_cast %79 : vector<1x64x16xf32> to vector<64x16xf32>
    %81 = vector.shape_cast %78 : vector<64x16xf32> to vector<1x64x16xf32>
    tpu.vector_store %arg3[%c5_48, %c0_49, %c0_50], %81 {strides = array<i32>} : memref<8x64x16xf32, #tpu.memory_space<vmem>>, vector<1x64x16xf32>,
    %c6 = arith.constant 6 : index
    %c0_51 = arith.constant 0 : index
    %c0_52 = arith.constant 0 : index
    %82 = vector.load %arg0[%c6, %c0_51, %c0_52] : memref<8x19x16xf32, #tpu.memory_space<vmem>>, vector<1x19x16xf32>
    %83 = vector.shape_cast %82 : vector<1x19x16xf32> to vector<19x16xf32>
    %cst_53 = arith.constant dense<0.000000e+00> : vector<64x16xf32>
    %84 = tpu.matmul %1, %83, %cst_53 {dimension_numbers = #tpu.dot_dimension_numbers<[1], [0], [0], [1], [0, 0, 1, 1], [], []>} : vector<64x19xf32>, vector<19x16xf32>, vector<64x16xf32> -> vector<64x16xf32>
    %85 = vector.broadcast %3 : vector<64x1xf32> to vector<64x16xf32>
    %86 = arith.addf %84, %85 : vector<64x16xf32>
    %cst_54 = arith.constant 0.000000e+00 : f32
    %87 = vector.broadcast %cst_54 : f32 to vector<64x16xf32>
    %88 = arith.cmpf ogt, %86, %87 : vector<64x16xf32>
    %cst_55 = arith.constant -2.500000e-01 : f32
    %89 = vector.broadcast %cst_55 : f32 to vector<64x16xf32>
    %90 = arith.mulf %86, %89 : vector<64x16xf32>
    %91 = arith.select %88, %86, %90 : vector<64x16xi1>, vector<64x16xf32>
    %c6_56 = arith.constant 6 : index
    %c0_57 = arith.constant 0 : index
    %c0_58 = arith.constant 0 : index
    %92 = vector.load %arg3[%c6_56, %c0_57, %c0_58] : memref<8x64x16xf32, #tpu.memory_space<vmem>>, vector<1x64x16xf32>
    %93 = vector.shape_cast %92 : vector<1x64x16xf32> to vector<64x16xf32>
    %94 = vector.shape_cast %91 : vector<64x16xf32> to vector<1x64x16xf32>
    tpu.vector_store %arg3[%c6_56, %c0_57, %c0_58], %94 {strides = array<i32>} : memref<8x64x16xf32, #tpu.memory_space<vmem>>, vector<1x64x16xf32>,
    %c7 = arith.constant 7 : index
    %c0_59 = arith.constant 0 : index
    %c0_60 = arith.constant 0 : index
    %95 = vector.load %arg0[%c7, %c0_59, %c0_60] : memref<8x19x16xf32, #tpu.memory_space<vmem>>, vector<1x19x16xf32>
    %96 = vector.shape_cast %95 : vector<1x19x16xf32> to vector<19x16xf32>
    %cst_61 = arith.constant dense<0.000000e+00> : vector<64x16xf32>
    %97 = tpu.matmul %1, %96, %cst_61 {dimension_numbers = #tpu.dot_dimension_numbers<[1], [0], [0], [1], [0, 0, 1, 1], [], []>} : vector<64x19xf32>, vector<19x16xf32>, vector<64x16xf32> -> vector<64x16xf32>
    %98 = vector.broadcast %3 : vector<64x1xf32> to vector<64x16xf32>
    %99 = arith.addf %97, %98 : vector<64x16xf32>
    %cst_62 = arith.constant 0.000000e+00 : f32
    %100 = vector.broadcast %cst_62 : f32 to vector<64x16xf32>
    %101 = arith.cmpf ogt, %99, %100 : vector<64x16xf32>
    %cst_63 = arith.constant -2.500000e-01 : f32
    %102 = vector.broadcast %cst_63 : f32 to vector<64x16xf32>
    %103 = arith.mulf %99, %102 : vector<64x16xf32>
    %104 = arith.select %101, %99, %103 : vector<64x16xi1>, vector<64x16xf32>
    %c7_64 = arith.constant 7 : index
    %c0_65 = arith.constant 0 : index
    %c0_66 = arith.constant 0 : index
    %105 = vector.load %arg3[%c7_64, %c0_65, %c0_66] : memref<8x64x16xf32, #tpu.memory_space<vmem>>, vector<1x64x16xf32>
    %106 = vector.shape_cast %105 : vector<1x64x16xf32> to vector<64x16xf32>
    %107 = vector.shape_cast %104 : vector<64x16xf32> to vector<1x64x16xf32>
    tpu.vector_store %arg3[%c7_64, %c0_65, %c0_66], %107 {strides = array<i32>} : memref<8x64x16xf32, #tpu.memory_space<vmem>>, vector<1x64x16xf32>,
    return
  }
}

</mosaic_0001>

<llo_original>
// kernel: _conv_transpose_1x1_leaky.1
$region0: #{_conv_transpose_1x1_leaky.1}
  #allocation0 [shape = 'u32[]', space=smem, size = 0x4, offset = 0x4, fixed_abs, tag = 'smem constant byte address 0x4 - core index']
  #allocation1 [shape = 'u32[144,128]{1,0:T(1,128)}', space=vmem, size = 0x12000, scoped, tag = 'internal scratch']
  %s0 = inlined_call_operand.vmem [shape: f32[8,19,16], index: 0, kind: input, shape index: {}]
  %s1 = inlined_call_operand.vmem [shape: f32[19,64], index: 1, kind: input, shape index: {}]
  %s2 = inlined_call_operand.vmem [shape: f32[1,64], index: 2, kind: input, shape index: {}]
  %s3 = inlined_call_operand.vmem [shape: f32[8,64,16], index: 3, kind: output, shape index: {}]
  %s4 = sld [smem:[#allocation0]]
  $region22: #{_conv_transpose_1x1_leaky.1} parent=0
    _
  %s6 = ssub.s32 1, %s4
  %s7 = scalar_select 0, %s6, %s4
  // Predicated region
  $region2: #{_conv_transpose_1x1_leaky.1} parent=0 // pred_check
    _
  $region3: #{_conv_transpose_1x1_leaky.1} parent=0 // pred_check_branch
    %9 = sbr.rel (0) target = $region5
  $region4: #{_conv_transpose_1x1_leaky.1} parent=0 // pred_region
    _
  $region5: #{_conv_transpose_1x1_leaky.1} parent=0 // pred_fallthru
    _
  // Predicated region
  $region6: #{_conv_transpose_1x1_leaky.1} parent=0 // pred_check
    _
  $region7: #{_conv_transpose_1x1_leaky.1} parent=0 // pred_check_branch
    %11 = sbr.rel (0) target = $region9
  $region8: #{_conv_transpose_1x1_leaky.1} parent=0 // pred_region
    _
  $region9: #{_conv_transpose_1x1_leaky.1} parent=0 // pred_fallthru
    _
  // Predicated region
  $region10: #{_conv_transpose_1x1_leaky.1} parent=0 // pred_check
    _
  $region11: #{_conv_transpose_1x1_leaky.1} parent=0 // pred_check_branch
    %13 = sbr.rel (0) target = $region13
  $region12: #{_conv_transpose_1x1_leaky.1} parent=0 // pred_region
    _
  $region13: #{_conv_transpose_1x1_leaky.1} parent=0 // pred_fallthru
    _
  %v14 = vld [vmem:[%s1] sm:$0xff]
  %v15 = vld [vmem:[%s1 + $0x8] sm:$0xff]
  %v16 = vld [vmem:[%s1 + $0x10] sm:$0x7]
  %17 = vxpose.xlu0.b32.start [1/16] %v14, 128
  %18 = vxpose.xlu0.b32.cont [2/16] %v15, 128
  %19 = vxpose.xlu0.b32.cont [3/16] %v16, 128
  %20 = vxpose.xlu0.b32.cont [4/16] 0.0, 128
  %21 = vxpose.xlu0.b32.cont [5/16] 0.0, 128
  %22 = vxpose.xlu0.b32.cont [6/16] 0.0, 128
  %23 = vxpose.xlu0.b32.cont [7/16] 0.0, 128
  %24 = vxpose.xlu0.b32.cont [8/16] 0.0, 128
  %25 = vxpose.xlu0.b32.cont [9/16] 0.0, 128
  %26 = vxpose.xlu0.b32.cont [10/16] 0.0, 128
  %27 = vxpose.xlu0.b32.cont [11/16] 0.0, 128
  %28 = vxpose.xlu0.b32.cont [12/16] 0.0, 128
  %29 = vxpose.xlu0.b32.cont [13/16] 0.0, 128
  %30 = vxpose.xlu0.b32.cont [14/16] 0.0, 128
  %31 = vxpose.xlu0.b32.cont [15/16] 0.0, 128
  %32 = vxpose.xlu0.b32.end [16/16] 0.0, 128
  %v33 = vpop.trf.xlu0
  %v34 = vpop.trf.xlu0
  %v35 = vpop.trf.xlu0
  %v36 = vpop.trf.xlu0
  %v37 = vpop.trf.xlu0
  %v38 = vpop.trf.xlu0
  %v39 = vpop.trf.xlu0
  %v40 = vpop.trf.xlu0
  %v41 = vpop.trf.xlu0
  %v42 = vpop.trf.xlu0
  %v43 = vpop.trf.xlu0
  %v44 = vpop.trf.xlu0
  %v45 = vpop.trf.xlu0
  %v46 = vpop.trf.xlu0
  %v47 = vpop.trf.xlu0
  %v48 = vpop.trf.xlu0
  %v49 = vld [vmem:[%s2] sm:$0x1]
  %50 = vxpose.xlu0.b32.start [1/16] %v49, 128
  %51 = vxpose.xlu0.b32.cont [2/16] 0.0, 128
  %52 = vxpose.xlu0.b32.cont [3/16] 0.0, 128
  %53 = vxpose.xlu0.b32.cont [4/16] 0.0, 128
  %54 = vxpose.xlu0.b32.cont [5/16] 0.0, 128
  %55 = vxpose.xlu0.b32.cont [6/16] 0.0, 128
  %56 = vxpose.xlu0.b32.cont [7/16] 0.0, 128
  %57 = vxpose.xlu0.b32.cont [8/16] 0.0, 128
  %58 = vxpose.xlu0.b32.cont [9/16] 0.0, 128
  %59 = vxpose.xlu0.b32.cont [10/16] 0.0, 128
  %60 = vxpose.xlu0.b32.cont [11/16] 0.0, 128
  %61 = vxpose.xlu0.b32.cont [12/16] 0.0, 128
  %62 = vxpose.xlu0.b32.cont [13/16] 0.0, 128
  %63 = vxpose.xlu0.b32.cont [14/16] 0.0, 128
  %64 = vxpose.xlu0.b32.cont [15/16] 0.0, 128
  %65 = vxpose.xlu0.b32.end [16/16] 0.0, 128
  %v66 = vpop.trf.xlu0
  %v67 = vpop.trf.xlu0
  %v68 = vpop.trf.xlu0
  %v69 = vpop.trf.xlu0
  %v70 = vpop.trf.xlu0
  %v71 = vpop.trf.xlu0
  %v72 = vpop.trf.xlu0
  %v73 = vpop.trf.xlu0
  %v74 = vpop.trf.xlu0
  %v75 = vpop.trf.xlu0
  %v76 = vpop.trf.xlu0
  %v77 = vpop.trf.xlu0
  %v78 = vpop.trf.xlu0
  %v79 = vpop.trf.xlu0
  %v80 = vpop.trf.xlu0
  %v81 = vpop.trf.xlu0
  %v82 = vld [vmem:[%s0] sm:$0xff]
  %v83 = vld [vmem:[%s0 + $0x8] sm:$0xff]
  %v84 = vld [vmem:[%s0 + $0x10] sm:$0x7]
  %86 = vset.pattern.permute.xlu0 0
  %87 = vperm.xlu0 %86, %v66
  %v88 = vpop.permute.xlu0 %87
  %91 = vset.pattern.permute.xlu0 0
  %92 = vperm.xlu0 %91, %v67
  %v93 = vpop.permute.xlu0 %92
  %96 = vset.pattern.permute.xlu0 0
  %97 = vperm.xlu0 %96, %v68
  %v98 = vpop.permute.xlu0 %97
  %101 = vset.pattern.permute.xlu0 0
  %102 = vperm.xlu0 %101, %v69
  %v103 = vpop.permute.xlu0 %102
  %106 = vset.pattern.permute.xlu0 0
  %107 = vperm.xlu0 %106, %v70
  %v108 = vpop.permute.xlu0 %107
  %111 = vset.pattern.permute.xlu0 0
  %112 = vperm.xlu0 %111, %v71
  %v113 = vpop.permute.xlu0 %112
  %116 = vset.pattern.permute.xlu0 0
  %117 = vperm.xlu0 %116, %v72
  %v118 = vpop.permute.xlu0 %117
  %121 = vset.pattern.permute.xlu0 0
  %122 = vperm.xlu0 %121, %v73
  %v123 = vpop.permute.xlu0 %122
  %vm125 = vcmask 154624
  %v127 = vsel %vm125, %v33, 0
  %v130 = vsel %vm125, %v34, 0
  %v133 = vsel %vm125, %v35, 0
  %v136 = vsel %vm125, %v36, 0
  %v139 = vsel %vm125, %v37, 0
  %v142 = vsel %vm125, %v38, 0
  %v145 = vsel %vm125, %v39, 0
  %v148 = vsel %vm125, %v40, 0
  %vm150 = vcmask 1042432
  %v152 = vsel %vm150, %v84, 0
  %154 = vmatprep.subr.mxu0 0.0
  %155 = vmatpush1.msra.mxu0 %v82
  %156 = vmatprep.subr.mxu0 0.0
  %157 = vmatpush1.msra.mxu0 %v83
  %158 = vmatprep.subr.mxu0 0.0
  %159 = vmatpush1.msra.mxu0 %v152
  %160 = vmatprep.subr.mxu0 0.0
  %161 = vmatpush1.msra.mxu0 0.0
  %162 = vmatprep.subr.mxu0 0.0
  %163 = vmatpush1.msra.mxu0 0.0
  %164 = vmatprep.subr.mxu0 0.0
  %165 = vmatpush1.msra.mxu0 0.0
  %166 = vmatprep.subr.mxu0 0.0
  %167 = vmatpush1.msra.mxu0 0.0
  %168 = vmatprep.subr.mxu0 0.0
  %169 = vmatpush1.msra.mxu0 0.0
  %170 = vmatprep.subr.mxu0 0.0
  %171 = vmatpush1.msra.mxu0 0.0
  %172 = vmatprep.subr.mxu0 0.0
  %173 = vmatpush1.msra.mxu0 0.0
  %174 = vmatprep.subr.mxu0 0.0
  %175 = vmatpush1.msra.mxu0 0.0
  %176 = vmatprep.subr.mxu0 0.0
  %177 = vmatpush1.msra.mxu0 0.0
  %178 = vmatprep.subr.mxu0 0.0
  %179 = vmatpush1.msra.mxu0 0.0
  %180 = vmatprep.subr.mxu0 0.0
  %181 = vmatpush1.msra.mxu0 0.0
  %182 = vmatprep.subr.mxu0 0.0
  %183 = vmatpush1.msra.mxu0 0.0
  %184 = vmatprep.subr.mxu0 0.0
  %185 = vmatpush1.msra.mxu0 0.0
  %186 = vmatprep.subr.mxu0 0.0
  %187 = vmatpush1.msra.mxu0 0.0
  %188 = vmatprep.subr.mxu0 0.0
  %189 = vmatpush1.msra.mxu0 0.0
  %190 = vmatprep.subr.mxu0 0.0
  %191 = vmatpush1.msra.mxu0 0.0
  %192 = vmatprep.subr.mxu0 0.0
  %193 = vmatpush1.msra.mxu0 0.0
  %194 = vmatprep.subr.mxu0 0.0
  %195 = vmatpush1.msra.mxu0 0.0
  %196 = vmatprep.subr.mxu0 0.0
  %197 = vmatpush1.msra.mxu0 0.0
  %198 = vmatprep.subr.mxu0 0.0
  %199 = vmatpush1.msra.mxu0 0.0
  %200 = vmatprep.subr.mxu0 0.0
  %201 = vmatpush1.msra.mxu0 0.0
  %202 = vmatprep.subr.mxu0 0.0
  %203 = vmatpush1.msra.mxu0 0.0
  %204 = vmatprep.subr.mxu0 0.0
  %205 = vmatpush1.msra.mxu0 0.0
  %206 = vmatprep.subr.mxu0 0.0
  %207 = vmatpush1.msra.mxu0 0.0
  %208 = vmatprep.subr.mxu0 0.0
  %209 = vmatpush1.msra.mxu0 0.0
  %210 = vmatprep.subr.mxu0 0.0
  %211 = vmatpush1.msra.mxu0 0.0
  %212 = vmatprep.subr.mxu0 0.0
  %213 = vmatpush1.msra.mxu0 0.0
  %214 = vmatprep.subr.mxu0 0.0
  %215 = vmatpush1.msra.mxu0 0.0
  %216 = vmatprep.subr.mxu0 0.0
  %217 = vmatpush1.msra.mxu0 0.0
  %218 = vmatprep.mubr.f32.mxu0 0.0
  %219 = vmatmul.mubr.f32.gmra.mrb[0].mxu0 %v127
  %v220 = vpop.f32.mrb[0].mxu0
  %v221 = vadd.f32 %v88, %v220
  %v222 = vpop.f32.mrb[0].mxu0
  %223 = vmatprep.mubr.f32.mxu0 0.0
  %224 = vmatmul.mubr.f32.gmra.mrb[0].mxu0 %v130
  %v225 = vpop.f32.mrb[0].mxu0
  %v226 = vadd.f32 %v93, %v225
  %v227 = vpop.f32.mrb[0].mxu0
  %228 = vmatprep.mubr.f32.mxu0 0.0
  %229 = vmatmul.mubr.f32.gmra.mrb[0].mxu0 %v133
  %v230 = vpop.f32.mrb[0].mxu0
  %v231 = vadd.f32 %v98, %v230
  %v232 = vpop.f32.mrb[0].mxu0
  %233 = vmatprep.mubr.f32.mxu0 0.0
  %234 = vmatmul.mubr.f32.gmra.mrb[0].mxu0 %v136
  %v235 = vpop.f32.mrb[0].mxu0
  %v236 = vadd.f32 %v103, %v235
  %v237 = vpop.f32.mrb[0].mxu0
  %238 = vmatprep.mubr.f32.mxu0 0.0
  %239 = vmatmul.mubr.f32.gmra.mrb[0].mxu0 %v139
  %v240 = vpop.f32.mrb[0].mxu0
  %v241 = vadd.f32 %v108, %v240
  %v242 = vpop.f32.mrb[0].mxu0
  %243 = vmatprep.mubr.f32.mxu0 0.0
  %244 = vmatmul.mubr.f32.gmra.mrb[0].mxu0 %v142
  %v245 = vpop.f32.mrb[0].mxu0
  %v246 = vadd.f32 %v113, %v245
  %v247 = vpop.f32.mrb[0].mxu0
  %248 = vmatprep.mubr.f32.mxu0 0.0
  %249 = vmatmul.mubr.f32.gmra.mrb[0].mxu0 %v145
  %v250 = vpop.f32.mrb[0].mxu0
  %v251 = vadd.f32 %v118, %v250
  %v252 = vpop.f32.mrb[0].mxu0
  %253 = vmatprep.mubr.f32.mxu0 0.0
  %254 = vmatmul.mubr.f32.gmra.mrb[0].mxu0 %v148
  %v255 = vpop.f32.mrb[0].mxu0
  %v256 = vadd.f32 %v123, %v255
  %v257 = vpop.f32.mrb[0].mxu0
  %258 = vdwg.mxu0
  %vm259 = vcmp.gt.f32.partialorder %v221, 0.0
  %vm260 = vcmp.gt.f32.partialorder %v226, 0.0
  %vm261 = vcmp.gt.f32.partialorder %v231, 0.0
  %vm262 = vcmp.gt.f32.partialorder %v236, 0.0
  %vm263 = vcmp.gt.f32.partialorder %v241, 0.0
  %vm264 = vcmp.gt.f32.partialorder %v246, 0.0
  %vm265 = vcmp.gt.f32.partialorder %v251, 0.0
  %vm266 = vcmp.gt.f32.partialorder %v256, 0.0
  %v267 = vmul.f32 %v221, -0.25
  %v268 = vmul.f32 %v226, -0.25
  %v269 = vmul.f32 %v231, -0.25
  %v270 = vmul.f32 %v236, -0.25
  %v271 = vmul.f32 %v241, -0.25
  %v272 = vmul.f32 %v246, -0.25
  %v273 = vmul.f32 %v251, -0.25
  %v274 = vmul.f32 %v256, -0.25
  %v275 = vsel %vm259, %v221, %v267
  %v276 = vsel %vm260, %v226, %v268
  %v277 = vsel %vm261, %v231, %v269
  %v278 = vsel %vm262, %v236, %v270
  %v279 = vsel %vm263, %v241, %v271
  %v280 = vsel %vm264, %v246, %v272
  %v281 = vsel %vm265, %v251, %v273
  %v282 = vsel %vm266, %v256, %v274
  %vm283 = vcmask 130048
  %284 = vst.msk [vmem:[%s3] sm:$0xff] %vm283, %v275
  %285 = vst.msk [vmem:[%s3 + $0x8] sm:$0xff] %vm283, %v276
  %286 = vst.msk [vmem:[%s3 + $0x10] sm:$0xff] %vm283, %v277
  %287 = vst.msk [vmem:[%s3 + $0x18] sm:$0xff] %vm283, %v278
  %288 = vst.msk [vmem:[%s3 + $0x20] sm:$0xff] %vm283, %v279
  %289 = vst.msk [vmem:[%s3 + $0x28] sm:$0xff] %vm283, %v280
  %290 = vst.msk [vmem:[%s3 + $0x30] sm:$0xff] %vm283, %v281
  %291 = vst.msk [vmem:[%s3 + $0x38] sm:$0xff] %vm283, %v282
  %s292 = scalar_lea.vmem %s0, 24
  %v293 = vld [vmem:[%s292] sm:$0xff]
  %v294 = vld [vmem:[%s292 + $0x8] sm:$0xff]
  %v295 = vld [vmem:[%s292 + $0x10] sm:$0x7]
  %v297 = vsel %vm150, %v295, 0
  %299 = vmatprep.subr.mxu0 0.0
  %300 = vmatpush1.msra.mxu0 %v293
  %301 = vmatprep.subr.mxu0 0.0
  %302 = vmatpush1.msra.mxu0 %v294
  %303 = vmatprep.subr.mxu0 0.0
  %304 = vmatpush1.msra.mxu0 %v297
  %305 = vmatprep.subr.mxu0 0.0
  %306 = vmatpush1.msra.mxu0 0.0
  %307 = vmatprep.subr.mxu0 0.0
  %308 = vmatpush1.msra.mxu0 0.0
  %309 = vmatprep.subr.mxu0 0.0
  %310 = vmatpush1.msra.mxu0 0.0
  %311 = vmatprep.subr.mxu0 0.0
  %312 = vmatpush1.msra.mxu0 0.0
  %313 = vmatprep.subr.mxu0 0.0
  %314 = vmatpush1.msra.mxu0 0.0
  %315 = vmatprep.subr.mxu0 0.0
  %316 = vmatpush1.msra.mxu0 0.0
  %317 = vmatprep.subr.mxu0 0.0
  %318 = vmatpush1.msra.mxu0 0.0
  %319 = vmatprep.subr.mxu0 0.0
  %320 = vmatpush1.msra.mxu0 0.0
  %321 = vmatprep.subr.mxu0 0.0
  %322 = vmatpush1.msra.mxu0 0.0
  %323 = vmatprep.subr.mxu0 0.0
  %324 = vmatpush1.msra.mxu0 0.0
  %325 = vmatprep.subr.mxu0 0.0
  %326 = vmatpush1.msra.mxu0 0.0
  %327 = vmatprep.subr.mxu0 0.0
  %328 = vmatpush1.msra.mxu0 0.0
  %329 = vmatprep.subr.mxu0 0.0
  %330 = vmatpush1.msra.mxu0 0.0
  %331 = vmatprep.subr.mxu0 0.0
  %332 = vmatpush1.msra.mxu0 0.0
  %333 = vmatprep.subr.mxu0 0.0
  %334 = vmatpush1.msra.mxu0 0.0
  %335 = vmatprep.subr.mxu0 0.0
  %336 = vmatpush1.msra.mxu0 0.0
  %337 = vmatprep.subr.mxu0 0.0
  %338 = vmatpush1.msra.mxu0 0.0
  %339 = vmatprep.subr.mxu0 0.0
  %340 = vmatpush1.msra.mxu0 0.0
  %341 = vmatprep.subr.mxu0 0.0
  %342 = vmatpush1.msra.mxu0 0.0
  %343 = vmatprep.subr.mxu0 0.0
  %344 = vmatpush1.msra.mxu0 0.0
  %345 = vmatprep.subr.mxu0 0.0
  %346 = vmatpush1.msra.mxu0 0.0
  %347 = vmatprep.subr.mxu0 0.0
  %348 = vmatpush1.msra.mxu0 0.0
  %349 = vmatprep.subr.mxu0 0.0
  %350 = vmatpush1.msra.mxu0 0.0
  %351 = vmatprep.subr.mxu0 0.0
  %352 = vmatpush1.msra.mxu0 0.0
  %353 = vmatprep.subr.mxu0 0.0
  %354 = vmatpush1.msra.mxu0 0.0
  %355 = vmatprep.subr.mxu0 0.0
  %356 = vmatpush1.msra.mxu0 0.0
  %357 = vmatprep.subr.mxu0 0.0
  %358 = vmatpush1.msra.mxu0 0.0
  %359 = vmatprep.subr.mxu0 0.0
  %360 = vmatpush1.msra.mxu0 0.0
  %361 = vmatprep.subr.mxu0 0.0
  %362 = vmatpush1.msra.mxu0 0.0
  %363 = vmatprep.mubr.f32.mxu0 0.0
  %364 = vmatmul.mubr.f32.gmra.mrb[0].mxu0 %v127
  %v365 = vpop.f32.mrb[0].mxu0
  %v366 = vadd.f32 %v88, %v365
  %v367 = vpop.f32.mrb[0].mxu0
  %368 = vmatprep.mubr.f32.mxu0 0.0
  %369 = vmatmul.mubr.f32.gmra.mrb[0].mxu0 %v130
  %v370 = vpop.f32.mrb[0].mxu0
  %v371 = vadd.f32 %v93, %v370
  %v372 = vpop.f32.mrb[0].mxu0
  %373 = vmatprep.mubr.f32.mxu0 0.0
  %374 = vmatmul.mubr.f32.gmra.mrb[0].mxu0 %v133
  %v375 = vpop.f32.mrb[0].mxu0
  %v376 = vadd.f32 %v98, %v375
  %v377 = vpop.f32.mrb[0].mxu0
  %378 = vmatprep.mubr.f32.mxu0 0.0
  %379 = vmatmul.mubr.f32.gmra.mrb[0].mxu0 %v136
  %v380 = vpop.f32.mrb[0].mxu0
  %v381 = vadd.f32 %v103, %v380
  %v382 = vpop.f32.mrb[0].mxu0
  %383 = vmatprep.mubr.f32.mxu0 0.0
  %384 = vmatmul.mubr.f32.gmra.mrb[0].mxu0 %v139
  %v385 = vpop.f32.mrb[0].mxu0
  %v386 = vadd.f32 %v108, %v385
  %v387 = vpop.f32.mrb[0].mxu0
  %388 = vmatprep.mubr.f32.mxu0 0.0
  %389 = vmatmul.mubr.f32.gmra.mrb[0].mxu0 %v142
  %v390 = vpop.f32.mrb[0].mxu0
  %v391 = vadd.f32 %v113, %v390
  %v392 = vpop.f32.mrb[0].mxu0
  %393 = vmatprep.mubr.f32.mxu0 0.0
  %394 = vmatmul.mubr.f32.gmra.mrb[0].mxu0 %v145
  %v395 = vpop.f32.mrb[0].mxu0
  %v396 = vadd.f32 %v118, %v395
  %v397 = vpop.f32.mrb[0].mxu0
  %398 = vmatprep.mubr.f32.mxu0 0.0
  %399 = vmatmul.mubr.f32.gmra.mrb[0].mxu0 %v148
  %v400 = vpop.f32.mrb[0].mxu0
  %v401 = vadd.f32 %v123, %v400
  %v402 = vpop.f32.mrb[0].mxu0
  %403 = vdwg.mxu0
  %vm404 = vcmp.gt.f32.partialorder %v366, 0.0
  %vm405 = vcmp.gt.f32.partialorder %v371, 0.0
  %vm406 = vcmp.gt.f32.partialorder %v376, 0.0
  %vm407 = vcmp.gt.f32.partialorder %v381, 0.0
  %vm408 = vcmp.gt.f32.partialorder %v386, 0.0
  %vm409 = vcmp.gt.f32.partialorder %v391, 0.0
  %vm410 = vcmp.gt.f32.partialorder %v396, 0.0
  %vm411 = vcmp.gt.f32.partialorder %v401, 0.0
  %v412 = vmul.f32 %v366, -0.25
  %v413 = vmul.f32 %v371, -0.25
  %v414 = vmul.f32 %v376, -0.25
  %v415 = vmul.f32 %v381, -0.25
  %v416 = vmul.f32 %v386, -0.25
  %v417 = vmul.f32 %v391, -0.25
  %v418 = vmul.f32 %v396, -0.25
  %v419 = vmul.f32 %v401, -0.25
  %v420 = vsel %vm404, %v366, %v412
  %v421 = vsel %vm405, %v371, %v413
  %v422 = vsel %vm406, %v376, %v414
  %v423 = vsel %vm407, %v381, %v415
  %v424 = vsel %vm408, %v386, %v416
  %v425 = vsel %vm409, %v391, %v417
  %v426 = vsel %vm410, %v396, %v418
  %v427 = vsel %vm411, %v401, %v419
  %s428 = scalar_lea.vmem %s3, 64
  %429 = vst.msk [vmem:[%s428] sm:$0xff] %vm283, %v420
  %430 = vst.msk [vmem:[%s428 + $0x8] sm:$0xff] %vm283, %v421
  %431 = vst.msk [vmem:[%s428 + $0x10] sm:$0xff] %vm283, %v422
  %432 = vst.msk [vmem:[%s428 + $0x18] sm:$0xff] %vm283, %v423
  %433 = vst.msk [vmem:[%s428 + $0x20] sm:$0xff] %vm283, %v424
  %434 = vst.msk [vmem:[%s428 + $0x28] sm:$0xff] %vm283, %v425
  %435 = vst.msk [vmem:[%s428 + $0x30] sm:$0xff] %vm283, %v426
  %436 = vst.msk [vmem:[%s428 + $0x38] sm:$0xff] %vm283, %v427
  %s437 = scalar_lea.vmem %s0, 48
  %v438 = vld [vmem:[%s437] sm:$0xff]
  %v439 = vld [vmem:[%s437 + $0x8] sm:$0xff]
  %v440 = vld [vmem:[%s437 + $0x10] sm:$0x7]
  %v442 = vsel %vm150, %v440, 0
  %444 = vmatprep.subr.mxu0 0.0
  %445 = vmatpush1.msra.mxu0 %v438
  %446 = vmatprep.subr.mxu0 0.0
  %447 = vmatpush1.msra.mxu0 %v439
  %448 = vmatprep.subr.mxu0 0.0
  %449 = vmatpush1.msra.mxu0 %v442
  %450 = vmatprep.subr.mxu0 0.0
  %451 = vmatpush1.msra.mxu0 0.0
  %452 = vmatprep.subr.mxu0 0.0
  %453 = vmatpush1.msra.mxu0 0.0
  %454 = vmatprep.subr.mxu0 0.0
  %455 = vmatpush1.msra.mxu0 0.0
  %456 = vmatprep.subr.mxu0 0.0
  %457 = vmatpush1.msra.mxu0 0.0
  %458 = vmatprep.subr.mxu0 0.0
  %459 = vmatpush1.msra.mxu0 0.0
  %460 = vmatprep.subr.mxu0 0.0
  %461 = vmatpush1.msra.mxu0 0.0
  %462 = vmatprep.subr.mxu0 0.0
  %463 = vmatpush1.msra.mxu0 0.0
  %464 = vmatprep.subr.mxu0 0.0
  %465 = vmatpush1.msra.mxu0 0.0
  %466 = vmatprep.subr.mxu0 0.0
  %467 = vmatpush1.msra.mxu0 0.0
  %468 = vmatprep.subr.mxu0 0.0
  %469 = vmatpush1.msra.mxu0 0.0
  %470 = vmatprep.subr.mxu0 0.0
  %471 = vmatpush1.msra.mxu0 0.0
  %472 = vmatprep.subr.mxu0 0.0
  %473 = vmatpush1.msra.mxu0 0.0
  %474 = vmatprep.subr.mxu0 0.0
  %475 = vmatpush1.msra.mxu0 0.0
  %476 = vmatprep.subr.mxu0 0.0
  %477 = vmatpush1.msra.mxu0 0.0
  %478 = vmatprep.subr.mxu0 0.0
  %479 = vmatpush1.msra.mxu0 0.0
  %480 = vmatprep.subr.mxu0 0.0
  %481 = vmatpush1.msra.mxu0 0.0
  %482 = vmatprep.subr.mxu0 0.0
  %483 = vmatpush1.msra.mxu0 0.0
  %484 = vmatprep.subr.mxu0 0.0
  %485 = vmatpush1.msra.mxu0 0.0
  %486 = vmatprep.subr.mxu0 0.0
  %487 = vmatpush1.msra.mxu0 0.0
  %488 = vmatprep.subr.mxu0 0.0
  %489 = vmatpush1.msra.mxu0 0.0
  %490 = vmatprep.subr.mxu0 0.0
  %491 = vmatpush1.msra.mxu0 0.0
  %492 = vmatprep.subr.mxu0 0.0
  %493 = vmatpush1.msra.mxu0 0.0
  %494 = vmatprep.subr.mxu0 0.0
  %495 = vmatpush1.msra.mxu0 0.0
  %496 = vmatprep.subr.mxu0 0.0
  %497 = vmatpush1.msra.mxu0 0.0
  %498 = vmatprep.subr.mxu0 0.0
  %499 = vmatpush1.msra.mxu0 0.0
  %500 = vmatprep.subr.mxu0 0.0
  %501 = vmatpush1.msra.mxu0 0.0
  %502 = vmatprep.subr.mxu0 0.0
  %503 = vmatpush1.msra.mxu0 0.0
  %504 = vmatprep.subr.mxu0 0.0
  %505 = vmatpush1.msra.mxu0 0.0
  %506 = vmatprep.subr.mxu0 0.0
  %507 = vmatpush1.msra.mxu0 0.0
  %508 = vmatprep.mubr.f32.mxu0 0.0
  %509 = vmatmul.mubr.f32.gmra.mrb[0].mxu0 %v127
  %v510 = vpop.f32.mrb[0].mxu0
  %v511 = vadd.f32 %v88, %v510
  %v512 = vpop.f32.mrb[0].mxu0
  %513 = vmatprep.mubr.f32.mxu0 0.0
  %514 = vmatmul.mubr.f32.gmra.mrb[0].mxu0 %v130
  %v515 = vpop.f32.mrb[0].mxu0
  %v516 = vadd.f32 %v93, %v515
  %v517 = vpop.f32.mrb[0].mxu0
  %518 = vmatprep.mubr.f32.mxu0 0.0
  %519 = vmatmul.mubr.f32.gmra.mrb[0].mxu0 %v133
  %v520 = vpop.f32.mrb[0].mxu0
  %v521 = vadd.f32 %v98, %v520
  %v522 = vpop.f32.mrb[0].mxu0
  %523 = vmatprep.mubr.f32.mxu0 0.0
  %524 = vmatmul.mubr.f32.gmra.mrb[0].mxu0 %v136
  %v525 = vpop.f32.mrb[0].mxu0
  %v526 = vadd.f32 %v103, %v525
  %v527 = vpop.f32.mrb[0].mxu0
  %528 = vmatprep.mubr.f32.mxu0 0.0
  %529 = vmatmul.mubr.f32.gmra.mrb[0].mxu0 %v139
  %v530 = vpop.f32.mrb[0].mxu0
  %v531 = vadd.f32 %v108, %v530
  %v532 = vpop.f32.mrb[0].mxu0
  %533 = vmatprep.mubr.f32.mxu0 0.0
  %534 = vmatmul.mubr.f32.gmra.mrb[0].mxu0 %v142
  %v535 = vpop.f32.mrb[0].mxu0
  %v536 = vadd.f32 %v113, %v535
  %v537 = vpop.f32.mrb[0].mxu0
  %538 = vmatprep.mubr.f32.mxu0 0.0
  %539 = vmatmul.mubr.f32.gmra.mrb[0].mxu0 %v145
  %v540 = vpop.f32.mrb[0].mxu0
  %v541 = vadd.f32 %v118, %v540
  %v542 = vpop.f32.mrb[0].mxu0
  %543 = vmatprep.mubr.f32.mxu0 0.0
  %544 = vmatmul.mubr.f32.gmra.mrb[0].mxu0 %v148
  %v545 = vpop.f32.mrb[0].mxu0
  %v546 = vadd.f32 %v123, %v545
  %v547 = vpop.f32.mrb[0].mxu0
  %548 = vdwg.mxu0
  %vm549 = vcmp.gt.f32.partialorder %v511, 0.0
  %vm550 = vcmp.gt.f32.partialorder %v516, 0.0
  %vm551 = vcmp.gt.f32.partialorder %v521, 0.0
  %vm552 = vcmp.gt.f32.partialorder %v526, 0.0
  %vm553 = vcmp.gt.f32.partialorder %v531, 0.0
  %vm554 = vcmp.gt.f32.partialorder %v536, 0.0
  %vm555 = vcmp.gt.f32.partialorder %v541, 0.0
  %vm556 = vcmp.gt.f32.partialorder %v546, 0.0
  %v557 = vmul.f32 %v511, -0.25
  %v558 = vmul.f32 %v516, -0.25
  %v559 = vmul.f32 %v521, -0.25
  %v560 = vmul.f32 %v526, -0.25
  %v561 = vmul.f32 %v531, -0.25
  %v562 = vmul.f32 %v536, -0.25
  %v563 = vmul.f32 %v541, -0.25
  %v564 = vmul.f32 %v546, -0.25
  %v565 = vsel %vm549, %v511, %v557
  %v566 = vsel %vm550, %v516, %v558
  %v567 = vsel %vm551, %v521, %v559
  %v568 = vsel %vm552, %v526, %v560
  %v569 = vsel %vm553, %v531, %v561
  %v570 = vsel %vm554, %v536, %v562
  %v571 = vsel %vm555, %v541, %v563
  %v572 = vsel %vm556, %v546, %v564
  %s573 = scalar_lea.vmem %s3, 128
  %574 = vst.msk [vmem:[%s573] sm:$0xff] %vm283, %v565
  %575 = vst.msk [vmem:[%s573 + $0x8] sm:$0xff] %vm283, %v566
  %576 = vst.msk [vmem:[%s573 + $0x10] sm:$0xff] %vm283, %v567
  %577 = vst.msk [vmem:[%s573 + $0x18] sm:$0xff] %vm283, %v568
  %578 = vst.msk [vmem:[%s573 + $0x20] sm:$0xff] %vm283, %v569
  %579 = vst.msk [vmem:[%s573 + $0x28] sm:$0xff] %vm283, %v570
  %580 = vst.msk [vmem:[%s573 + $0x30] sm:$0xff] %vm283, %v571
  %581 = vst.msk [vmem:[%s573 + $0x38] sm:$0xff] %vm283, %v572
  %s582 = scalar_lea.vmem %s0, 72
  %v583 = vld [vmem:[%s582] sm:$0xff]
  %v584 = vld [vmem:[%s582 + $0x8] sm:$0xff]
  %v585 = vld [vmem:[%s582 + $0x10] sm:$0x7]
  %v587 = vsel %vm150, %v585, 0
  %589 = vmatprep.subr.mxu0 0.0
  %590 = vmatpush1.msra.mxu0 %v583
  %591 = vmatprep.subr.mxu0 0.0
  %592 = vmatpush1.msra.mxu0 %v584
  %593 = vmatprep.subr.mxu0 0.0
  %594 = vmatpush1.msra.mxu0 %v587
  %595 = vmatprep.subr.mxu0 0.0
  %596 = vmatpush1.msra.mxu0 0.0
  %597 = vmatprep.subr.mxu0 0.0
  %598 = vmatpush1.msra.mxu0 0.0
  %599 = vmatprep.subr.mxu0 0.0
  %600 = vmatpush1.msra.mxu0 0.0
  %601 = vmatprep.subr.mxu0 0.0
  %602 = vmatpush1.msra.mxu0 0.0
  %603 = vmatprep.subr.mxu0 0.0
  %604 = vmatpush1.msra.mxu0 0.0
  %605 = vmatprep.subr.mxu0 0.0
  %606 = vmatpush1.msra.mxu0 0.0
  %607 = vmatprep.subr.mxu0 0.0
  %608 = vmatpush1.msra.mxu0 0.0
  %609 = vmatprep.subr.mxu0 0.0
  %610 = vmatpush1.msra.mxu0 0.0
  %611 = vmatprep.subr.mxu0 0.0
  %612 = vmatpush1.msra.mxu0 0.0
  %613 = vmatprep.subr.mxu0 0.0
  %614 = vmatpush1.msra.mxu0 0.0
  %615 = vmatprep.subr.mxu0 0.0
  %616 = vmatpush1.msra.mxu0 0.0
  %617 = vmatprep.subr.mxu0 0.0
  %618 = vmatpush1.msra.mxu0 0.0
  %619 = vmatprep.subr.mxu0 0.0
  %620 = vmatpush1.msra.mxu0 0.0
  %621 = vmatprep.subr.mxu0 0.0
  %622 = vmatpush1.msra.mxu0 0.0
  %623 = vmatprep.subr.mxu0 0.0
  %624 = vmatpush1.msra.mxu0 0.0
  %625 = vmatprep.subr.mxu0 0.0
  %626 = vmatpush1.msra.mxu0 0.0
  %627 = vmatprep.subr.mxu0 0.0
  %628 = vmatpush1.msra.mxu0 0.0
  %629 = vmatprep.subr.mxu0 0.0
  %630 = vmatpush1.msra.mxu0 0.0
  %631 = vmatprep.subr.mxu0 0.0
  %632 = vmatpush1.msra.mxu0 0.0
  %633 = vmatprep.subr.mxu0 0.0
  %634 = vmatpush1.msra.mxu0 0.0
  %635 = vmatprep.subr.mxu0 0.0
  %636 = vmatpush1.msra.mxu0 0.0
  %637 = vmatprep.subr.mxu0 0.0
  %638 = vmatpush1.msra.mxu0 0.0
  %639 = vmatprep.subr.mxu0 0.0
  %640 = vmatpush1.msra.mxu0 0.0
  %641 = vmatprep.subr.mxu0 0.0
  %642 = vmatpush1.msra.mxu0 0.0
  %643 = vmatprep.subr.mxu0 0.0
  %644 = vmatpush1.msra.mxu0 0.0
  %645 = vmatprep.subr.mxu0 0.0
  %646 = vmatpush1.msra.mxu0 0.0
  %647 = vmatprep.subr.mxu0 0.0
  %648 = vmatpush1.msra.mxu0 0.0
  %649 = vmatprep.subr.mxu0 0.0
  %650 = vmatpush1.msra.mxu0 0.0
  %651 = vmatprep.subr.mxu0 0.0
  %652 = vmatpush1.msra.mxu0 0.0
  %653 = vmatprep.mubr.f32.mxu0 0.0
  %654 = vmatmul.mubr.f32.gmra.mrb[0].mxu0 %v127
  %v655 = vpop.f32.mrb[0].mxu0
  %v656 = vadd.f32 %v88, %v655
  %v657 = vpop.f32.mrb[0].mxu0
  %658 = vmatprep.mubr.f32.mxu0 0.0
  %659 = vmatmul.mubr.f32.gmra.mrb[0].mxu0 %v130
  %v660 = vpop.f32.mrb[0].mxu0
  %v661 = vadd.f32 %v93, %v660
  %v662 = vpop.f32.mrb[0].mxu0
  %663 = vmatprep.mubr.f32.mxu0 0.0
  %664 = vmatmul.mubr.f32.gmra.mrb[0].mxu0 %v133
  %v665 = vpop.f32.mrb[0].mxu0
  %v666 = vadd.f32 %v98, %v665
  %v667 = vpop.f32.mrb[0].mxu0
  %668 = vmatprep.mubr.f32.mxu0 0.0
  %669 = vmatmul.mubr.f32.gmra.mrb[0].mxu0 %v136
  %v670 = vpop.f32.mrb[0].mxu0
  %v671 = vadd.f32 %v103, %v670
  %v672 = vpop.f32.mrb[0].mxu0
  %673 = vmatprep.mubr.f32.mxu0 0.0
  %674 = vmatmul.mubr.f32.gmra.mrb[0].mxu0 %v139
  %v675 = vpop.f32.mrb[0].mxu0
  %v676 = vadd.f32 %v108, %v675
  %v677 = vpop.f32.mrb[0].mxu0
  %678 = vmatprep.mubr.f32.mxu0 0.0
  %679 = vmatmul.mubr.f32.gmra.mrb[0].mxu0 %v142
  %v680 = vpop.f32.mrb[0].mxu0
  %v681 = vadd.f32 %v113, %v680
  %v682 = vpop.f32.mrb[0].mxu0
  %683 = vmatprep.mubr.f32.mxu0 0.0
  %684 = vmatmul.mubr.f32.gmra.mrb[0].mxu0 %v145
  %v685 = vpop.f32.mrb[0].mxu0
  %v686 = vadd.f32 %v118, %v685
  %v687 = vpop.f32.mrb[0].mxu0
  %688 = vmatprep.mubr.f32.mxu0 0.0
  %689 = vmatmul.mubr.f32.gmra.mrb[0].mxu0 %v148
  %v690 = vpop.f32.mrb[0].mxu0
  %v691 = vadd.f32 %v123, %v690
  %v692 = vpop.f32.mrb[0].mxu0
  %693 = vdwg.mxu0
  %vm694 = vcmp.gt.f32.partialorder %v656, 0.0
  %vm695 = vcmp.gt.f32.partialorder %v661, 0.0
  %vm696 = vcmp.gt.f32.partialorder %v666, 0.0
  %vm697 = vcmp.gt.f32.partialorder %v671, 0.0
  %vm698 = vcmp.gt.f32.partialorder %v676, 0.0
  %vm699 = vcmp.gt.f32.partialorder %v681, 0.0
  %vm700 = vcmp.gt.f32.partialorder %v686, 0.0
  %vm701 = vcmp.gt.f32.partialorder %v691, 0.0
  %v702 = vmul.f32 %v656, -0.25
  %v703 = vmul.f32 %v661, -0.25
  %v704 = vmul.f32 %v666, -0.25
  %v705 = vmul.f32 %v671, -0.25
  %v706 = vmul.f32 %v676, -0.25
  %v707 = vmul.f32 %v681, -0.25
  %v708 = vmul.f32 %v686, -0.25
  %v709 = vmul.f32 %v691, -0.25
  %v710 = vsel %vm694, %v656, %v702
  %v711 = vsel %vm695, %v661, %v703
  %v712 = vsel %vm696, %v666, %v704
  %v713 = vsel %vm697, %v671, %v705
  %v714 = vsel %vm698, %v676, %v706
  %v715 = vsel %vm699, %v681, %v707
  %v716 = vsel %vm700, %v686, %v708
  %v717 = vsel %vm701, %v691, %v709
  %s718 = scalar_lea.vmem %s3, 192
  %719 = vst.msk [vmem:[%s718] sm:$0xff] %vm283, %v710
  %720 = vst.msk [vmem:[%s718 + $0x8] sm:$0xff] %vm283, %v711
  %721 = vst.msk [vmem:[%s718 + $0x10] sm:$0xff] %vm283, %v712
  %722 = vst.msk [vmem:[%s718 + $0x18] sm:$0xff] %vm283, %v713
  %723 = vst.msk [vmem:[%s718 + $0x20] sm:$0xff] %vm283, %v714
  %724 = vst.msk [vmem:[%s718 + $0x28] sm:$0xff] %vm283, %v715
  %725 = vst.msk [vmem:[%s718 + $0x30] sm:$0xff] %vm283, %v716
  %726 = vst.msk [vmem:[%s718 + $0x38] sm:$0xff] %vm283, %v717
  %s727 = scalar_lea.vmem %s0, 96
  %v728 = vld [vmem:[%s727] sm:$0xff]
  %v729 = vld [vmem:[%s727 + $0x8] sm:$0xff]
  %v730 = vld [vmem:[%s727 + $0x10] sm:$0x7]
  %v732 = vsel %vm150, %v730, 0
  %734 = vmatprep.subr.mxu0 0.0
  %735 = vmatpush1.msra.mxu0 %v728
  %736 = vmatprep.subr.mxu0 0.0
  %737 = vmatpush1.msra.mxu0 %v729
  %738 = vmatprep.subr.mxu0 0.0
  %739 = vmatpush1.msra.mxu0 %v732
  %740 = vmatprep.subr.mxu0 0.0
  %741 = vmatpush1.msra.mxu0 0.0
  %742 = vmatprep.subr.mxu0 0.0
  %743 = vmatpush1.msra.mxu0 0.0
  %744 = vmatprep.subr.mxu0 0.0
  %745 = vmatpush1.msra.mxu0 0.0
  %746 = vmatprep.subr.mxu0 0.0
  %747 = vmatpush1.msra.mxu0 0.0
  %748 = vmatprep.subr.mxu0 0.0
  %749 = vmatpush1.msra.mxu0 0.0
  %750 = vmatprep.subr.mxu0 0.0
  %751 = vmatpush1.msra.mxu0 0.0
  %752 = vmatprep.subr.mxu0 0.0
  %753 = vmatpush1.msra.mxu0 0.0
  %754 = vmatprep.subr.mxu0 0.0
  %755 = vmatpush1.msra.mxu0 0.0
  %756 = vmatprep.subr.mxu0 0.0
  %757 = vmatpush1.msra.mxu0 0.0
  %758 = vmatprep.subr.mxu0 0.0
  %759 = vmatpush1.msra.mxu0 0.0
  %760 = vmatprep.subr.mxu0 0.0
  %761 = vmatpush1.msra.mxu0 0.0
  %762 = vmatprep.subr.mxu0 0.0
  %763 = vmatpush1.msra.mxu0 0.0
  %764 = vmatprep.subr.mxu0 0.0
  %765 = vmatpush1.msra.mxu0 0.0
  %766 = vmatprep.subr.mxu0 0.0
  %767 = vmatpush1.msra.mxu0 0.0
  %768 = vmatprep.subr.mxu0 0.0
  %769 = vmatpush1.msra.mxu0 0.0
  %770 = vmatprep.subr.mxu0 0.0
  %771 = vmatpush1.msra.mxu0 0.0
  %772 = vmatprep.subr.mxu0 0.0
  %773 = vmatpush1.msra.mxu0 0.0
  %774 = vmatprep.subr.mxu0 0.0
  %775 = vmatpush1.msra.mxu0 0.0
  %776 = vmatprep.subr.mxu0 0.0
  %777 = vmatpush1.msra.mxu0 0.0
  %778 = vmatprep.subr.mxu0 0.0
  %779 = vmatpush1.msra.mxu0 0.0
  %780 = vmatprep.subr.mxu0 0.0
  %781 = vmatpush1.msra.mxu0 0.0
  %782 = vmatprep.subr.mxu0 0.0
  %783 = vmatpush1.msra.mxu0 0.0
  %784 = vmatprep.subr.mxu0 0.0
  %785 = vmatpush1.msra.mxu0 0.0
  %786 = vmatprep.subr.mxu0 0.0
  %787 = vmatpush1.msra.mxu0 0.0
  %788 = vmatprep.subr.mxu0 0.0
  %789 = vmatpush1.msra.mxu0 0.0
  %790 = vmatprep.subr.mxu0 0.0
  %791 = vmatpush1.msra.mxu0 0.0
  %792 = vmatprep.subr.mxu0 0.0
  %793 = vmatpush1.msra.mxu0 0.0
  %794 = vmatprep.subr.mxu0 0.0
  %795 = vmatpush1.msra.mxu0 0.0
  %796 = vmatprep.subr.mxu0 0.0
  %797 = vmatpush1.msra.mxu0 0.0
  %798 = vmatprep.mubr.f32.mxu0 0.0
  %799 = vmatmul.mubr.f32.gmra.mrb[0].mxu0 %v127
  %v800 = vpop.f32.mrb[0].mxu0
  %v801 = vadd.f32 %v88, %v800
  %v802 = vpop.f32.mrb[0].mxu0
  %803 = vmatprep.mubr.f32.mxu0 0.0
  %804 = vmatmul.mubr.f32.gmra.mrb[0].mxu0 %v130
  %v805 = vpop.f32.mrb[0].mxu0
  %v806 = vadd.f32 %v93, %v805
  %v807 = vpop.f32.mrb[0].mxu0
  %808 = vmatprep.mubr.f32.mxu0 0.0
  %809 = vmatmul.mubr.f32.gmra.mrb[0].mxu0 %v133
  %v810 = vpop.f32.mrb[0].mxu0
  %v811 = vadd.f32 %v98, %v810
  %v812 = vpop.f32.mrb[0].mxu0
  %813 = vmatprep.mubr.f32.mxu0 0.0
  %814 = vmatmul.mubr.f32.gmra.mrb[0].mxu0 %v136
  %v815 = vpop.f32.mrb[0].mxu0
  %v816 = vadd.f32 %v103, %v815
  %v817 = vpop.f32.mrb[0].mxu0
  %818 = vmatprep.mubr.f32.mxu0 0.0
  %819 = vmatmul.mubr.f32.gmra.mrb[0].mxu0 %v139
  %v820 = vpop.f32.mrb[0].mxu0
  %v821 = vadd.f32 %v108, %v820
  %v822 = vpop.f32.mrb[0].mxu0
  %823 = vmatprep.mubr.f32.mxu0 0.0
  %824 = vmatmul.mubr.f32.gmra.mrb[0].mxu0 %v142
  %v825 = vpop.f32.mrb[0].mxu0
  %v826 = vadd.f32 %v113, %v825
  %v827 = vpop.f32.mrb[0].mxu0
  %828 = vmatprep.mubr.f32.mxu0 0.0
  %829 = vmatmul.mubr.f32.gmra.mrb[0].mxu0 %v145
  %v830 = vpop.f32.mrb[0].mxu0
  %v831 = vadd.f32 %v118, %v830
  %v832 = vpop.f32.mrb[0].mxu0
  %833 = vmatprep.mubr.f32.mxu0 0.0
  %834 = vmatmul.mubr.f32.gmra.mrb[0].mxu0 %v148
  %v835 = vpop.f32.mrb[0].mxu0
  %v836 = vadd.f32 %v123, %v835
  %v837 = vpop.f32.mrb[0].mxu0
  %838 = vdwg.mxu0
  %vm839 = vcmp.gt.f32.partialorder %v801, 0.0
  %vm840 = vcmp.gt.f32.partialorder %v806, 0.0
  %vm841 = vcmp.gt.f32.partialorder %v811, 0.0
  %vm842 = vcmp.gt.f32.partialorder %v816, 0.0
  %vm843 = vcmp.gt.f32.partialorder %v821, 0.0
  %vm844 = vcmp.gt.f32.partialorder %v826, 0.0
  %vm845 = vcmp.gt.f32.partialorder %v831, 0.0
  %vm846 = vcmp.gt.f32.partialorder %v836, 0.0
  %v847 = vmul.f32 %v801, -0.25
  %v848 = vmul.f32 %v806, -0.25
  %v849 = vmul.f32 %v811, -0.25
  %v850 = vmul.f32 %v816, -0.25
  %v851 = vmul.f32 %v821, -0.25
  %v852 = vmul.f32 %v826, -0.25
  %v853 = vmul.f32 %v831, -0.25
  %v854 = vmul.f32 %v836, -0.25
  %v855 = vsel %vm839, %v801, %v847
  %v856 = vsel %vm840, %v806, %v848
  %v857 = vsel %vm841, %v811, %v849
  %v858 = vsel %vm842, %v816, %v850
  %v859 = vsel %vm843, %v821, %v851
  %v860 = vsel %vm844, %v826, %v852
  %v861 = vsel %vm845, %v831, %v853
  %v862 = vsel %vm846, %v836, %v854
  %s863 = scalar_lea.vmem %s3, 256
  %864 = vst.msk [vmem:[%s863] sm:$0xff] %vm283, %v855
  %865 = vst.msk [vmem:[%s863 + $0x8] sm:$0xff] %vm283, %v856
  %866 = vst.msk [vmem:[%s863 + $0x10] sm:$0xff] %vm283, %v857
  %867 = vst.msk [vmem:[%s863 + $0x18] sm:$0xff] %vm283, %v858
  %868 = vst.msk [vmem:[%s863 + $0x20] sm:$0xff] %vm283, %v859
  %869 = vst.msk [vmem:[%s863 + $0x28] sm:$0xff] %vm283, %v860
  %870 = vst.msk [vmem:[%s863 + $0x30] sm:$0xff] %vm283, %v861
  %871 = vst.msk [vmem:[%s863 + $0x38] sm:$0xff] %vm283, %v862
  %s872 = scalar_lea.vmem %s0, 120
  %v873 = vld [vmem:[%s872] sm:$0xff]
  %v874 = vld [vmem:[%s872 + $0x8] sm:$0xff]
  %v875 = vld [vmem:[%s872 + $0x10] sm:$0x7]
  %v877 = vsel %vm150, %v875, 0
  %879 = vmatprep.subr.mxu0 0.0
  %880 = vmatpush1.msra.mxu0 %v873
  %881 = vmatprep.subr.mxu0 0.0
  %882 = vmatpush1.msra.mxu0 %v874
  %883 = vmatprep.subr.mxu0 0.0
  %884 = vmatpush1.msra.mxu0 %v877
  %885 = vmatprep.subr.mxu0 0.0
  %886 = vmatpush1.msra.mxu0 0.0
  %887 = vmatprep.subr.mxu0 0.0
  %888 = vmatpush1.msra.mxu0 0.0
  %889 = vmatprep.subr.mxu0 0.0
  %890 = vmatpush1.msra.mxu0 0.0
  %891 = vmatprep.subr.mxu0 0.0
  %892 = vmatpush1.msra.mxu0 0.0
  %893 = vmatprep.subr.mxu0 0.0
  %894 = vmatpush1.msra.mxu0 0.0
  %895 = vmatprep.subr.mxu0 0.0
  %896 = vmatpush1.msra.mxu0 0.0
  %897 = vmatprep.subr.mxu0 0.0
  %898 = vmatpush1.msra.mxu0 0.0
  %899 = vmatprep.subr.mxu0 0.0
  %900 = vmatpush1.msra.mxu0 0.0
  %901 = vmatprep.subr.mxu0 0.0
  %902 = vmatpush1.msra.mxu0 0.0
  %903 = vmatprep.subr.mxu0 0.0
  %904 = vmatpush1.msra.mxu0 0.0
  %905 = vmatprep.subr.mxu0 0.0
  %906 = vmatpush1.msra.mxu0 0.0
  %907 = vmatprep.subr.mxu0 0.0
  %908 = vmatpush1.msra.mxu0 0.0
  %909 = vmatprep.subr.mxu0 0.0
  %910 = vmatpush1.msra.mxu0 0.0
  %911 = vmatprep.subr.mxu0 0.0
  %912 = vmatpush1.msra.mxu0 0.0
  %913 = vmatprep.subr.mxu0 0.0
  %914 = vmatpush1.msra.mxu0 0.0
  %915 = vmatprep.subr.mxu0 0.0
  %916 = vmatpush1.msra.mxu0 0.0
  %917 = vmatprep.subr.mxu0 0.0
  %918 = vmatpush1.msra.mxu0 0.0
  %919 = vmatprep.subr.mxu0 0.0
  %920 = vmatpush1.msra.mxu0 0.0
  %921 = vmatprep.subr.mxu0 0.0
  %922 = vmatpush1.msra.mxu0 0.0
  %923 = vmatprep.subr.mxu0 0.0
  %924 = vmatpush1.msra.mxu0 0.0
  %925 = vmatprep.subr.mxu0 0.0
  %926 = vmatpush1.msra.mxu0 0.0
  %927 = vmatprep.subr.mxu0 0.0
  %928 = vmatpush1.msra.mxu0 0.0
  %929 = vmatprep.subr.mxu0 0.0
  %930 = vmatpush1.msra.mxu0 0.0
  %931 = vmatprep.subr.mxu0 0.0
  %932 = vmatpush1.msra.mxu0 0.0
  %933 = vmatprep.subr.mxu0 0.0
  %934 = vmatpush1.msra.mxu0 0.0
  %935 = vmatprep.subr.mxu0 0.0
  %936 = vmatpush1.msra.mxu0 0.0
  %937 = vmatprep.subr.mxu0 0.0
  %938 = vmatpush1.msra.mxu0 0.0
  %939 = vmatprep.subr.mxu0 0.0
  %940 = vmatpush1.msra.mxu0 0.0
  %941 = vmatprep.subr.mxu0 0.0
  %942 = vmatpush1.msra.mxu0 0.0
  %943 = vmatprep.mubr.f32.mxu0 0.0
  %944 = vmatmul.mubr.f32.gmra.mrb[0].mxu0 %v127
  %v945 = vpop.f32.mrb[0].mxu0
  %v946 = vadd.f32 %v88, %v945
  %v947 = vpop.f32.mrb[0].mxu0
  %948 = vmatprep.mubr.f32.mxu0 0.0
  %949 = vmatmul.mubr.f32.gmra.mrb[0].mxu0 %v130
  %v950 = vpop.f32.mrb[0].mxu0
  %v951 = vadd.f32 %v93, %v950
  %v952 = vpop.f32.mrb[0].mxu0
  %953 = vmatprep.mubr.f32.mxu0 0.0
  %954 = vmatmul.mubr.f32.gmra.mrb[0].mxu0 %v133
  %v955 = vpop.f32.mrb[0].mxu0
  %v956 = vadd.f32 %v98, %v955
  %v957 = vpop.f32.mrb[0].mxu0
  %958 = vmatprep.mubr.f32.mxu0 0.0
  %959 = vmatmul.mubr.f32.gmra.mrb[0].mxu0 %v136
  %v960 = vpop.f32.mrb[0].mxu0
  %v961 = vadd.f32 %v103, %v960
  %v962 = vpop.f32.mrb[0].mxu0
  %963 = vmatprep.mubr.f32.mxu0 0.0
  %964 = vmatmul.mubr.f32.gmra.mrb[0].mxu0 %v139
  %v965 = vpop.f32.mrb[0].mxu0
  %v966 = vadd.f32 %v108, %v965
  %v967 = vpop.f32.mrb[0].mxu0
  %968 = vmatprep.mubr.f32.mxu0 0.0
  %969 = vmatmul.mubr.f32.gmra.mrb[0].mxu0 %v142
  %v970 = vpop.f32.mrb[0].mxu0
  %v971 = vadd.f32 %v113, %v970
  %v972 = vpop.f32.mrb[0].mxu0
  %973 = vmatprep.mubr.f32.mxu0 0.0
  %974 = vmatmul.mubr.f32.gmra.mrb[0].mxu0 %v145
  %v975 = vpop.f32.mrb[0].mxu0
  %v976 = vadd.f32 %v118, %v975
  %v977 = vpop.f32.mrb[0].mxu0
  %978 = vmatprep.mubr.f32.mxu0 0.0
  %979 = vmatmul.mubr.f32.gmra.mrb[0].mxu0 %v148
  %v980 = vpop.f32.mrb[0].mxu0
  %v981 = vadd.f32 %v123, %v980
  %v982 = vpop.f32.mrb[0].mxu0
  %983 = vdwg.mxu0
  %vm984 = vcmp.gt.f32.partialorder %v946, 0.0
  %vm985 = vcmp.gt.f32.partialorder %v951, 0.0
  %vm986 = vcmp.gt.f32.partialorder %v956, 0.0
  %vm987 = vcmp.gt.f32.partialorder %v961, 0.0
  %vm988 = vcmp.gt.f32.partialorder %v966, 0.0
  %vm989 = vcmp.gt.f32.partialorder %v971, 0.0
  %vm990 = vcmp.gt.f32.partialorder %v976, 0.0
  %vm991 = vcmp.gt.f32.partialorder %v981, 0.0
  %v992 = vmul.f32 %v946, -0.25
  %v993 = vmul.f32 %v951, -0.25
  %v994 = vmul.f32 %v956, -0.25
  %v995 = vmul.f32 %v961, -0.25
  %v996 = vmul.f32 %v966, -0.25
  %v997 = vmul.f32 %v971, -0.25
  %v998 = vmul.f32 %v976, -0.25
  %v999 = vmul.f32 %v981, -0.25
  %v1000 = vsel %vm984, %v946, %v992
  %v1001 = vsel %vm985, %v951, %v993
  %v1002 = vsel %vm986, %v956, %v994
  %v1003 = vsel %vm987, %v961, %v995
  %v1004 = vsel %vm988, %v966, %v996
  %v1005 = vsel %vm989, %v971, %v997
  %v1006 = vsel %vm990, %v976, %v998
  %v1007 = vsel %vm991, %v981, %v999
  %s1008 = scalar_lea.vmem %s3, 320
  %1009 = vst.msk [vmem:[%s1008] sm:$0xff] %vm283, %v1000
  %1010 = vst.msk [vmem:[%s1008 + $0x8] sm:$0xff] %vm283, %v1001
  %1011 = vst.msk [vmem:[%s1008 + $0x10] sm:$0xff] %vm283, %v1002
  %1012 = vst.msk [vmem:[%s1008 + $0x18] sm:$0xff] %vm283, %v1003
  %1013 = vst.msk [vmem:[%s1008 + $0x20] sm:$0xff] %vm283, %v1004
  %1014 = vst.msk [vmem:[%s1008 + $0x28] sm:$0xff] %vm283, %v1005
  %1015 = vst.msk [vmem:[%s1008 + $0x30] sm:$0xff] %vm283, %v1006
  %1016 = vst.msk [vmem:[%s1008 + $0x38] sm:$0xff] %vm283, %v1007
  %s1017 = scalar_lea.vmem %s0, 144
  %v1018 = vld [vmem:[%s1017] sm:$0xff]
  %v1019 = vld [vmem:[%s1017 + $0x8] sm:$0xff]
  %v1020 = vld [vmem:[%s1017 + $0x10] sm:$0x7]
  %v1022 = vsel %vm150, %v1020, 0
  %1024 = vmatprep.subr.mxu0 0.0
  %1025 = vmatpush1.msra.mxu0 %v1018
  %1026 = vmatprep.subr.mxu0 0.0
  %1027 = vmatpush1.msra.mxu0 %v1019
  %1028 = vmatprep.subr.mxu0 0.0
  %1029 = vmatpush1.msra.mxu0 %v1022
  %1030 = vmatprep.subr.mxu0 0.0
  %1031 = vmatpush1.msra.mxu0 0.0
  %1032 = vmatprep.subr.mxu0 0.0
  %1033 = vmatpush1.msra.mxu0 0.0
  %1034 = vmatprep.subr.mxu0 0.0
  %1035 = vmatpush1.msra.mxu0 0.0
  %1036 = vmatprep.subr.mxu0 0.0
  %1037 = vmatpush1.msra.mxu0 0.0
  %1038 = vmatprep.subr.mxu0 0.0
  %1039 = vmatpush1.msra.mxu0 0.0
  %1040 = vmatprep.subr.mxu0 0.0
  %1041 = vmatpush1.msra.mxu0 0.0
  %1042 = vmatprep.subr.mxu0 0.0
  %1043 = vmatpush1.msra.mxu0 0.0
  %1044 = vmatprep.subr.mxu0 0.0
  %1045 = vmatpush1.msra.mxu0 0.0
  %1046 = vmatprep.subr.mxu0 0.0
  %1047 = vmatpush1.msra.mxu0 0.0
  %1048 = vmatprep.subr.mxu0 0.0
  %1049 = vmatpush1.msra.mxu0 0.0
  %1050 = vmatprep.subr.mxu0 0.0
  %1051 = vmatpush1.msra.mxu0 0.0
  %1052 = vmatprep.subr.mxu0 0.0
  %1053 = vmatpush1.msra.mxu0 0.0
  %1054 = vmatprep.subr.mxu0 0.0
  %1055 = vmatpush1.msra.mxu0 0.0
  %1056 = vmatprep.subr.mxu0 0.0
  %1057 = vmatpush1.msra.mxu0 0.0
  %1058 = vmatprep.subr.mxu0 0.0
  %1059 = vmatpush1.msra.mxu0 0.0
  %1060 = vmatprep.subr.mxu0 0.0
  %1061 = vmatpush1.msra.mxu0 0.0
  %1062 = vmatprep.subr.mxu0 0.0
  %1063 = vmatpush1.msra.mxu0 0.0
  %1064 = vmatprep.subr.mxu0 0.0
  %1065 = vmatpush1.msra.mxu0 0.0
  %1066 = vmatprep.subr.mxu0 0.0
  %1067 = vmatpush1.msra.mxu0 0.0
  %1068 = vmatprep.subr.mxu0 0.0
  %1069 = vmatpush1.msra.mxu0 0.0
  %1070 = vmatprep.subr.mxu0 0.0
  %1071 = vmatpush1.msra.mxu0 0.0
  %1072 = vmatprep.subr.mxu0 0.0
  %1073 = vmatpush1.msra.mxu0 0.0
  %1074 = vmatprep.subr.mxu0 0.0
  %1075 = vmatpush1.msra.mxu0 0.0
  %1076 = vmatprep.subr.mxu0 0.0
  %1077 = vmatpush1.msra.mxu0 0.0
  %1078 = vmatprep.subr.mxu0 0.0
  %1079 = vmatpush1.msra.mxu0 0.0
  %1080 = vmatprep.subr.mxu0 0.0
  %1081 = vmatpush1.msra.mxu0 0.0
  %1082 = vmatprep.subr.mxu0 0.0
  %1083 = vmatpush1.msra.mxu0 0.0
  %1084 = vmatprep.subr.mxu0 0.0
  %1085 = vmatpush1.msra.mxu0 0.0
  %1086 = vmatprep.subr.mxu0 0.0
  %1087 = vmatpush1.msra.mxu0 0.0
  %1088 = vmatprep.mubr.f32.mxu0 0.0
  %1089 = vmatmul.mubr.f32.gmra.mrb[0].mxu0 %v127
  %v1090 = vpop.f32.mrb[0].mxu0
  %v1091 = vadd.f32 %v88, %v1090
  %v1092 = vpop.f32.mrb[0].mxu0
  %1093 = vmatprep.mubr.f32.mxu0 0.0
  %1094 = vmatmul.mubr.f32.gmra.mrb[0].mxu0 %v130
  %v1095 = vpop.f32.mrb[0].mxu0
  %v1096 = vadd.f32 %v93, %v1095
  %v1097 = vpop.f32.mrb[0].mxu0
  %1098 = vmatprep.mubr.f32.mxu0 0.0
  %1099 = vmatmul.mubr.f32.gmra.mrb[0].mxu0 %v133
  %v1100 = vpop.f32.mrb[0].mxu0
  %v1101 = vadd.f32 %v98, %v1100
  %v1102 = vpop.f32.mrb[0].mxu0
  %1103 = vmatprep.mubr.f32.mxu0 0.0
  %1104 = vmatmul.mubr.f32.gmra.mrb[0].mxu0 %v136
  %v1105 = vpop.f32.mrb[0].mxu0
  %v1106 = vadd.f32 %v103, %v1105
  %v1107 = vpop.f32.mrb[0].mxu0
  %1108 = vmatprep.mubr.f32.mxu0 0.0
  %1109 = vmatmul.mubr.f32.gmra.mrb[0].mxu0 %v139
  %v1110 = vpop.f32.mrb[0].mxu0
  %v1111 = vadd.f32 %v108, %v1110
  %v1112 = vpop.f32.mrb[0].mxu0
  %1113 = vmatprep.mubr.f32.mxu0 0.0
  %1114 = vmatmul.mubr.f32.gmra.mrb[0].mxu0 %v142
  %v1115 = vpop.f32.mrb[0].mxu0
  %v1116 = vadd.f32 %v113, %v1115
  %v1117 = vpop.f32.mrb[0].mxu0
  %1118 = vmatprep.mubr.f32.mxu0 0.0
  %1119 = vmatmul.mubr.f32.gmra.mrb[0].mxu0 %v145
  %v1120 = vpop.f32.mrb[0].mxu0
  %v1121 = vadd.f32 %v118, %v1120
  %v1122 = vpop.f32.mrb[0].mxu0
  %1123 = vmatprep.mubr.f32.mxu0 0.0
  %1124 = vmatmul.mubr.f32.gmra.mrb[0].mxu0 %v148
  %v1125 = vpop.f32.mrb[0].mxu0
  %v1126 = vadd.f32 %v123, %v1125
  %v1127 = vpop.f32.mrb[0].mxu0
  %1128 = vdwg.mxu0
  %vm1129 = vcmp.gt.f32.partialorder %v1091, 0.0
  %vm1130 = vcmp.gt.f32.partialorder %v1096, 0.0
  %vm1131 = vcmp.gt.f32.partialorder %v1101, 0.0
  %vm1132 = vcmp.gt.f32.partialorder %v1106, 0.0
  %vm1133 = vcmp.gt.f32.partialorder %v1111, 0.0
  %vm1134 = vcmp.gt.f32.partialorder %v1116, 0.0
  %vm1135 = vcmp.gt.f32.partialorder %v1121, 0.0
  %vm1136 = vcmp.gt.f32.partialorder %v1126, 0.0
  %v1137 = vmul.f32 %v1091, -0.25
  %v1138 = vmul.f32 %v1096, -0.25
  %v1139 = vmul.f32 %v1101, -0.25
  %v1140 = vmul.f32 %v1106, -0.25
  %v1141 = vmul.f32 %v1111, -0.25
  %v1142 = vmul.f32 %v1116, -0.25
  %v1143 = vmul.f32 %v1121, -0.25
  %v1144 = vmul.f32 %v1126, -0.25
  %v1145 = vsel %vm1129, %v1091, %v1137
  %v1146 = vsel %vm1130, %v1096, %v1138
  %v1147 = vsel %vm1131, %v1101, %v1139
  %v1148 = vsel %vm1132, %v1106, %v1140
  %v1149 = vsel %vm1133, %v1111, %v1141
  %v1150 = vsel %vm1134, %v1116, %v1142
  %v1151 = vsel %vm1135, %v1121, %v1143
  %v1152 = vsel %vm1136, %v1126, %v1144
  %s1153 = scalar_lea.vmem %s3, 384
  %1154 = vst.msk [vmem:[%s1153] sm:$0xff] %vm283, %v1145
  %1155 = vst.msk [vmem:[%s1153 + $0x8] sm:$0xff] %vm283, %v1146
  %1156 = vst.msk [vmem:[%s1153 + $0x10] sm:$0xff] %vm283, %v1147
  %1157 = vst.msk [vmem:[%s1153 + $0x18] sm:$0xff] %vm283, %v1148
  %1158 = vst.msk [vmem:[%s1153 + $0x20] sm:$0xff] %vm283, %v1149
  %1159 = vst.msk [vmem:[%s1153 + $0x28] sm:$0xff] %vm283, %v1150
  %1160 = vst.msk [vmem:[%s1153 + $0x30] sm:$0xff] %vm283, %v1151
  %1161 = vst.msk [vmem:[%s1153 + $0x38] sm:$0xff] %vm283, %v1152
  %s1162 = scalar_lea.vmem %s0, 168
  %v1163 = vld [vmem:[%s1162] sm:$0xff]
  %v1164 = vld [vmem:[%s1162 + $0x8] sm:$0xff]
  %v1165 = vld [vmem:[%s1162 + $0x10] sm:$0x7]
  %v1167 = vsel %vm150, %v1165, 0
  %1169 = vmatprep.subr.mxu0 0.0
  %1170 = vmatpush1.msra.mxu0 %v1163
  %1171 = vmatprep.subr.mxu0 0.0
  %1172 = vmatpush1.msra.mxu0 %v1164
  %1173 = vmatprep.subr.mxu0 0.0
  %1174 = vmatpush1.msra.mxu0 %v1167
  %1175 = vmatprep.subr.mxu0 0.0
  %1176 = vmatpush1.msra.mxu0 0.0
  %1177 = vmatprep.subr.mxu0 0.0
  %1178 = vmatpush1.msra.mxu0 0.0
  %1179 = vmatprep.subr.mxu0 0.0
  %1180 = vmatpush1.msra.mxu0 0.0
  %1181 = vmatprep.subr.mxu0 0.0
  %1182 = vmatpush1.msra.mxu0 0.0
  %1183 = vmatprep.subr.mxu0 0.0
  %1184 = vmatpush1.msra.mxu0 0.0
  %1185 = vmatprep.subr.mxu0 0.0
  %1186 = vmatpush1.msra.mxu0 0.0
  %1187 = vmatprep.subr.mxu0 0.0
  %1188 = vmatpush1.msra.mxu0 0.0
  %1189 = vmatprep.subr.mxu0 0.0
  %1190 = vmatpush1.msra.mxu0 0.0
  %1191 = vmatprep.subr.mxu0 0.0
  %1192 = vmatpush1.msra.mxu0 0.0
  %1193 = vmatprep.subr.mxu0 0.0
  %1194 = vmatpush1.msra.mxu0 0.0
  %1195 = vmatprep.subr.mxu0 0.0
  %1196 = vmatpush1.msra.mxu0 0.0
  %1197 = vmatprep.subr.mxu0 0.0
  %1198 = vmatpush1.msra.mxu0 0.0
  %1199 = vmatprep.subr.mxu0 0.0
  %1200 = vmatpush1.msra.mxu0 0.0
  %1201 = vmatprep.subr.mxu0 0.0
  %1202 = vmatpush1.msra.mxu0 0.0
  %1203 = vmatprep.subr.mxu0 0.0
  %1204 = vmatpush1.msra.mxu0 0.0
  %1205 = vmatprep.subr.mxu0 0.0
  %1206 = vmatpush1.msra.mxu0 0.0
  %1207 = vmatprep.subr.mxu0 0.0
  %1208 = vmatpush1.msra.mxu0 0.0
  %1209 = vmatprep.subr.mxu0 0.0
  %1210 = vmatpush1.msra.mxu0 0.0
  %1211 = vmatprep.subr.mxu0 0.0
  %1212 = vmatpush1.msra.mxu0 0.0
  %1213 = vmatprep.subr.mxu0 0.0
  %1214 = vmatpush1.msra.mxu0 0.0
  %1215 = vmatprep.subr.mxu0 0.0
  %1216 = vmatpush1.msra.mxu0 0.0
  %1217 = vmatprep.subr.mxu0 0.0
  %1218 = vmatpush1.msra.mxu0 0.0
  %1219 = vmatprep.subr.mxu0 0.0
  %1220 = vmatpush1.msra.mxu0 0.0
  %1221 = vmatprep.subr.mxu0 0.0
  %1222 = vmatpush1.msra.mxu0 0.0
  %1223 = vmatprep.subr.mxu0 0.0
  %1224 = vmatpush1.msra.mxu0 0.0
  %1225 = vmatprep.subr.mxu0 0.0
  %1226 = vmatpush1.msra.mxu0 0.0
  %1227 = vmatprep.subr.mxu0 0.0
  %1228 = vmatpush1.msra.mxu0 0.0
  %1229 = vmatprep.subr.mxu0 0.0
  %1230 = vmatpush1.msra.mxu0 0.0
  %1231 = vmatprep.subr.mxu0 0.0
  %1232 = vmatpush1.msra.mxu0 0.0
  %1233 = vmatprep.mubr.f32.mxu0 0.0
  %1234 = vmatmul.mubr.f32.gmra.mrb[0].mxu0 %v127
  %v1235 = vpop.f32.mrb[0].mxu0
  %v1236 = vadd.f32 %v88, %v1235
  %v1237 = vpop.f32.mrb[0].mxu0
  %1238 = vmatprep.mubr.f32.mxu0 0.0
  %1239 = vmatmul.mubr.f32.gmra.mrb[0].mxu0 %v130
  %v1240 = vpop.f32.mrb[0].mxu0
  %v1241 = vadd.f32 %v93, %v1240
  %v1242 = vpop.f32.mrb[0].mxu0
  %1243 = vmatprep.mubr.f32.mxu0 0.0
  %1244 = vmatmul.mubr.f32.gmra.mrb[0].mxu0 %v133
  %v1245 = vpop.f32.mrb[0].mxu0
  %v1246 = vadd.f32 %v98, %v1245
  %v1247 = vpop.f32.mrb[0].mxu0
  %1248 = vmatprep.mubr.f32.mxu0 0.0
  %1249 = vmatmul.mubr.f32.gmra.mrb[0].mxu0 %v136
  %v1250 = vpop.f32.mrb[0].mxu0
  %v1251 = vadd.f32 %v103, %v1250
  %v1252 = vpop.f32.mrb[0].mxu0
  %1253 = vmatprep.mubr.f32.mxu0 0.0
  %1254 = vmatmul.mubr.f32.gmra.mrb[0].mxu0 %v139
  %v1255 = vpop.f32.mrb[0].mxu0
  %v1256 = vadd.f32 %v108, %v1255
  %v1257 = vpop.f32.mrb[0].mxu0
  %1258 = vmatprep.mubr.f32.mxu0 0.0
  %1259 = vmatmul.mubr.f32.gmra.mrb[0].mxu0 %v142
  %v1260 = vpop.f32.mrb[0].mxu0
  %v1261 = vadd.f32 %v113, %v1260
  %v1262 = vpop.f32.mrb[0].mxu0
  %1263 = vmatprep.mubr.f32.mxu0 0.0
  %1264 = vmatmul.mubr.f32.gmra.mrb[0].mxu0 %v145
  %v1265 = vpop.f32.mrb[0].mxu0
  %v1266 = vadd.f32 %v118, %v1265
  %v1267 = vpop.f32.mrb[0].mxu0
  %1268 = vmatprep.mubr.f32.mxu0 0.0
  %1269 = vmatmul.mubr.f32.gmra.mrb[0].mxu0 %v148
  %v1270 = vpop.f32.mrb[0].mxu0
  %v1271 = vadd.f32 %v123, %v1270
  %v1272 = vpop.f32.mrb[0].mxu0
  %1273 = vdwg.mxu0
  %vm1274 = vcmp.gt.f32.partialorder %v1236, 0.0
  %vm1275 = vcmp.gt.f32.partialorder %v1241, 0.0
  %vm1276 = vcmp.gt.f32.partialorder %v1246, 0.0
  %vm1277 = vcmp.gt.f32.partialorder %v1251, 0.0
  %vm1278 = vcmp.gt.f32.partialorder %v1256, 0.0
  %vm1279 = vcmp.gt.f32.partialorder %v1261, 0.0
  %vm1280 = vcmp.gt.f32.partialorder %v1266, 0.0
  %vm1281 = vcmp.gt.f32.partialorder %v1271, 0.0
  %v1282 = vmul.f32 %v1236, -0.25
  %v1283 = vmul.f32 %v1241, -0.25
  %v1284 = vmul.f32 %v1246, -0.25
  %v1285 = vmul.f32 %v1251, -0.25
  %v1286 = vmul.f32 %v1256, -0.25
  %v1287 = vmul.f32 %v1261, -0.25
  %v1288 = vmul.f32 %v1266, -0.25
  %v1289 = vmul.f32 %v1271, -0.25
  %v1290 = vsel %vm1274, %v1236, %v1282
  %v1291 = vsel %vm1275, %v1241, %v1283
  %v1292 = vsel %vm1276, %v1246, %v1284
  %v1293 = vsel %vm1277, %v1251, %v1285
  %v1294 = vsel %vm1278, %v1256, %v1286
  %v1295 = vsel %vm1279, %v1261, %v1287
  %v1296 = vsel %vm1280, %v1266, %v1288
  %v1297 = vsel %vm1281, %v1271, %v1289
  %s1298 = scalar_lea.vmem %s3, 448
  %1299 = vst.msk [vmem:[%s1298] sm:$0xff] %vm283, %v1290
  %1300 = vst.msk [vmem:[%s1298 + $0x8] sm:$0xff] %vm283, %v1291
  %1301 = vst.msk [vmem:[%s1298 + $0x10] sm:$0xff] %vm283, %v1292
  %1302 = vst.msk [vmem:[%s1298 + $0x18] sm:$0xff] %vm283, %v1293
  %1303 = vst.msk [vmem:[%s1298 + $0x20] sm:$0xff] %vm283, %v1294
  %1304 = vst.msk [vmem:[%s1298 + $0x28] sm:$0xff] %vm283, %v1295
  %1305 = vst.msk [vmem:[%s1298 + $0x30] sm:$0xff] %vm283, %v1296
  %1306 = vst.msk [vmem:[%s1298 + $0x38] sm:$0xff] %vm283, %v1297
  // Predicated region
  $region14: #{_conv_transpose_1x1_leaky.1} parent=0 // pred_check
    _
  $region15: #{_conv_transpose_1x1_leaky.1} parent=0 // pred_check_branch
    %1308 = sbr.rel (0) target = $region17
  $region16: #{_conv_transpose_1x1_leaky.1} parent=0 // pred_region
    _
  $region17: #{_conv_transpose_1x1_leaky.1} parent=0 // pred_fallthru
    _
  // Predicated region
  $region18: #{_conv_transpose_1x1_leaky.1} parent=0 // pred_check
    _
  $region19: #{_conv_transpose_1x1_leaky.1} parent=0 // pred_check_branch
    %1310 = sbr.rel (0) target = $region21
  $region20: #{_conv_transpose_1x1_leaky.1} parent=0 // pred_region
    _
  $region21: #{_conv_transpose_1x1_leaky.1} parent=0 // pred_fallthru
    _

</llo_original>
